<compile_context>
chip_gen: v7x
topology: tpu7x:2x2x1
jax: 0.10.0
libtpu: 0.0.40
codegen_flags: <defaults>
</compile_context>

<pallas_src>
import jax
import jax.numpy as jnp
from jax import lax
from jax.experimental import pallas as pl
from jax.experimental.pallas import tpu as pltpu

EPS = 1e-5
LANE = 128


def _largest_divisor_leq(n, cap):
    cap = max(1, min(n, cap))
    for d in range(cap, 0, -1):
        if n % d == 0:
            return d
    return 1


# --------- kernel 1: 3x3 conv (bf16 MXU, f32 acc) + BN partial stats ---------
def _make_conv_stats_kernel(TH, W2, K3, Cpad):
    def kernel(xe_ref, xo_ref, w_ref, ye_ref, yo_ref, s_ref, ss_ref):
        # xe/xo_ref: (TH+2, W2, 3*Cin) f32  dj-folded column-parity views of the
        #            zero-padded input rows for this row tile (2-row halo).
        # w_ref    : (3, 3*Cin, Cpad) bf16  row tap di, channels ordered (dj, Cin).
        # ye/yo_ref: (TH, W2, Cpad) bf16    conv at even / odd output columns.
        # s/ss_ref : (1, Cpad) f32          per-tile partial sum / sum-of-squares.
        def conv(x_ref):
            acc = jnp.zeros((TH * W2, Cpad), jnp.float32)
            for di in range(3):                      # 3 taps, each K = 3*Cin
                xs = x_ref[pl.ds(di, TH), :, :].reshape(TH * W2, K3)
                acc = acc + jnp.dot(xs.astype(jnp.bfloat16), w_ref[di],
                                    preferred_element_type=jnp.float32)
            return acc

        ye = conv(xe_ref)
        yo = conv(xo_ref)
        # BN partial stats in f32, computed before the bf16 downcast.
        s_ref[...] = (jnp.sum(ye, axis=0, keepdims=True)
                      + jnp.sum(yo, axis=0, keepdims=True))
        ss_ref[...] = (jnp.sum(ye * ye, axis=0, keepdims=True)
                       + jnp.sum(yo * yo, axis=0, keepdims=True))
        ye_ref[...] = ye.reshape(TH, W2, Cpad).astype(jnp.bfloat16)
        yo_ref[...] = yo.reshape(TH, W2, Cpad).astype(jnp.bfloat16)

    return kernel


# --------- kernel 2: fused BN-apply + ReLU + 2x2 max-pool --------------------
def _make_bn_relu_pool_kernel(TH2, W2, Cpad):
    def kernel(ye_ref, yo_ref, sc_ref, sh_ref, o_ref):
        # ye/yo: (2*TH2, W2, Cpad) bf16;  sc/sh: (1, Cpad) f32;  o: (TH2, W2, Cpad) f32
        sc = sc_ref[...]
        sh = sh_ref[...]
        ye = ye_ref[...].astype(jnp.float32) * sc + sh
        yo = yo_ref[...].astype(jnp.float32) * sc + sh
        cm = jnp.maximum(jnp.maximum(ye, yo), 0.0)       # ReLU + column pool
        cm = cm.reshape(TH2, 2, W2, Cpad)                # leading-dim split (free)
        o_ref[...] = jnp.maximum(cm[:, 0], cm[:, 1])     # row pool

    return kernel


# --------- wrapper ------------------------------------------------------------
def conv_block_forward(x, weight, bias, gamma, beta):
    """x: (N, Cin, H, W) f32; weight: (Cout, Cin, 3, 3). Returns (N, Cout, H//2, W//2)."""
    del bias  # per-channel conv bias is a no-op before training-mode BatchNorm
    N, Cin, H, W = x.shape
    Cout = weight.shape[0]
    # TODO(synk): generalize to W % 16 != 0 (needs a non-tile-aligned in-kernel reshape).
    assert H % 2 == 0 and W % 16 == 0
    H2, W2 = H // 2, W // 2
    Cpad = ((Cout + LANE - 1) // LANE) * LANE
    K3 = 3 * Cin
    f32 = jnp.float32

    # Row-tile for kernel 1: divides H, keeps >= 2 tiles per image (intra-image
    # pipelining) and the per-tap M dimension (TH*W2) around <= 512 rows.
    TH = _largest_divisor_leq(H, min(max(H // 2, 1), max(512 // W2, 1)))
    RT = H // TH

    # ---- wrapper glue (input side, small tensors only) -----------------------
    # TODO(synk): pipelines that keep activations NHWC can skip this lane-sparse
    # NCHW->NHWC transpose and feed the padded views directly.
    x_nhwc = jnp.transpose(x, (0, 2, 3, 1)).astype(f32)            # (N, H, W, Cin)
    xp = jnp.pad(x_nhwc, ((0, 0), (1, 1), (1, 1), (0, 0)))         # (N, H+2, W+2, Cin)
    # column-parity views: v[k][..., m, :] = padded column 2*m + k
    v = [xp[:, :, k:k + 2 * W2:2, :] for k in range(4)]
    # dj folded into the contraction (channel) dim: (N, H+2, W2, 3*Cin)
    xcat_e = jnp.concatenate([v[0], v[1], v[2]], axis=-1)
    xcat_o = jnp.concatenate([v[1], v[2], v[3]], axis=-1)

    def chunk_rows(a):  # (N, H+2, W2, K3) -> (N, RT, TH+2, W2, K3) with 2-row halo
        return jnp.stack([a[:, r * TH:r * TH + TH + 2] for r in range(RT)], axis=1)

    xe_t = chunk_rows(xcat_e)
    xo_t = chunk_rows(xcat_o)

    # weights: (3, 3*Cin, Cpad) bf16, channel order (dj, Cin) to match xcat_*
    w_k = jnp.transpose(weight, (2, 3, 1, 0)).reshape(3, K3, Cout).astype(f32)
    w_k = jnp.pad(w_k, ((0, 0), (0, 0), (0, Cpad - Cout))).astype(jnp.bfloat16)
    g_pad = jnp.pad(gamma.astype(f32), (0, Cpad - Cout)).reshape(1, Cpad)
    bt_pad = jnp.pad(beta.astype(f32), (0, Cpad - Cout)).reshape(1, Cpad)

    # ---- pass 1: conv 3x3 + per-tile BN partial stats ------------------------
    ye, yo, psum, psq = pl.pallas_call(
        _make_conv_stats_kernel(TH, W2, K3, Cpad),
        grid=(N, RT),
        in_specs=[
            pl.BlockSpec((None, None, TH + 2, W2, K3), lambda n, r: (n, r, 0, 0, 0)),
            pl.BlockSpec((None, None, TH + 2, W2, K3), lambda n, r: (n, r, 0, 0, 0)),
            pl.BlockSpec((3, K3, Cpad), lambda n, r: (0, 0, 0)),
        ],
        out_specs=[
            pl.BlockSpec((None, TH, W2, Cpad), lambda n, r: (n, r, 0, 0)),
            pl.BlockSpec((None, TH, W2, Cpad), lambda n, r: (n, r, 0, 0)),
            pl.BlockSpec((None, None, 1, Cpad), lambda n, r: (n, r, 0, 0)),
            pl.BlockSpec((None, None, 1, Cpad), lambda n, r: (n, r, 0, 0)),
        ],
        out_shape=[
            jax.ShapeDtypeStruct((N, H, W2, Cpad), jnp.bfloat16),
            jax.ShapeDtypeStruct((N, H, W2, Cpad), jnp.bfloat16),
            jax.ShapeDtypeStruct((N, RT, 1, Cpad), f32),
            jax.ShapeDtypeStruct((N, RT, 1, Cpad), f32),
        ],
        compiler_params=pltpu.CompilerParams(
            dimension_semantics=("parallel", "parallel")),
    )(xe_t, xo_t, w_k)

    # ---- tiny O(C) reduction -> global batch statistics (training-mode BN) ---
    # TODO(synk): E[x^2]-E[x]^2 in f32 may need a Welford pass for very large N*H*W.
    cnt = jnp.float32(N * H * W)
    mean = jnp.sum(psum, axis=(0, 1)) / cnt                        # (1, Cpad)
    var = jnp.maximum(jnp.sum(psq, axis=(0, 1)) / cnt - mean * mean, 0.0)
    scale = g_pad * lax.rsqrt(var + EPS)                           # (1, Cpad)
    shift = bt_pad - mean * scale

    # ---- pass 2: fused BN-apply + ReLU + 2x2 max-pool -------------------------
    # ~1 MB ye/yo blocks keep this memory-bound pass near the HBM roofline.
    TH2 = _largest_divisor_leq(H2, max((1 << 20) // (4 * W2 * Cpad), 1))
    pooled = pl.pallas_call(
        _make_bn_relu_pool_kernel(TH2, W2, Cpad),
        grid=(N, H2 // TH2),
        in_specs=[
            pl.BlockSpec((None, 2 * TH2, W2, Cpad), lambda n, t: (n, t, 0, 0)),
            pl.BlockSpec((None, 2 * TH2, W2, Cpad), lambda n, t: (n, t, 0, 0)),
            pl.BlockSpec((1, Cpad), lambda n, t: (0, 0)),
            pl.BlockSpec((1, Cpad), lambda n, t: (0, 0)),
        ],
        out_specs=pl.BlockSpec((None, TH2, W2, Cpad), lambda n, t: (n, t, 0, 0)),
        out_shape=jax.ShapeDtypeStruct((N, H2, W2, Cpad), f32),
        compiler_params=pltpu.CompilerParams(
            dimension_semantics=("parallel", "parallel")),
    )(ye, yo, scale, shift)

    # back to NCHW for PyTorch output parity (small glue on the pooled output)
    # TODO(synk): for Cout << 128 a sublane-packed (channels-in-sublanes, W2-in-lanes)
    # layout would avoid the Cpad padding overhead in ye/yo/pooled.
    return jnp.transpose(pooled[:, :, :, :Cout], (0, 3, 1, 2))


# --------- pure-JAX reference (verification) ----------------------------------
def conv_block_reference(x, weight, bias, gamma, beta):
    y = lax.conv_general_dilated(
        x, weight, window_strides=(1, 1), padding="SAME",
        dimension_numbers=("NCHW", "OIHW", "NCHW"),
        precision=lax.Precision.HIGHEST,
    ) + bias[None, :, None, None]
    mean = jnp.mean(y, axis=(0, 2, 3), keepdims=True)
    var = jnp.mean((y - mean) ** 2, axis=(0, 2, 3), keepdims=True)
    y = (y - mean) * lax.rsqrt(var + EPS)
    y = y * gamma[None, :, None, None] + beta[None, :, None, None]
    y = jnp.maximum(y, 0.0)
    n, c, h, w = y.shape
    return y.reshape(n, c, h // 2, 2, w // 2, 2).max(axis=(3, 5))


if __name__ == "__main__":
    N, Cin, Cout, H, W = 2, 4, 8, 16, 16

    key = jax.random.PRNGKey(0)
    kx, kw, kb = jax.random.split(key, 3)

    x = jax.random.normal(kx, (N, Cin, H, W), dtype=jnp.float32)
    fan_in = Cin * 3 * 3
    bound = 1.0 / jnp.sqrt(fan_in)
    weight = jax.random.uniform(kw, (Cout, Cin, 3, 3), jnp.float32, -bound, bound)
    bias = jax.random.uniform(kb, (Cout,), jnp.float32, -bound, bound)
    gamma = jnp.ones((Cout,), jnp.float32)   # BatchNorm2d default affine init
    beta = jnp.zeros((Cout,), jnp.float32)

    forward = jax.jit(conv_block_forward)
    out = jax.block_until_ready(forward(x, weight, bias, gamma, beta))

    ref = conv_block_reference(x, weight, bias, gamma, beta)
    assert out.shape == (N, Cout, H // 2, W // 2), out.shape
    max_err = float(jnp.max(jnp.abs(out - ref)))
    # bf16 MXU inputs + bf16 conv intermediate -> ~1e-2-scale absolute error on
    # the unit-variance BN output; tolerance relaxed accordingly (perf review).
    assert jnp.allclose(out, ref, rtol=3e-2, atol=3e-2), max_err

    print("KERNEL_OK")
</pallas_src>

<mosaic_0001>
module attributes {stable_mosaic.version = 11 : i64} {
  func.func @kernel(%arg0: i32, %arg1: i32, %arg2: memref<1x1x10x8x12xf32, #tpu.memory_space<vmem>>, %arg3: memref<1x1x10x8x12xf32, #tpu.memory_space<vmem>>, %arg4: memref<3x12x128xbf16, #tpu.memory_space<vmem>>, %arg5: memref<1x8x8x128xbf16, #tpu.memory_space<vmem>>, %arg6: memref<1x8x8x128xbf16, #tpu.memory_space<vmem>>, %arg7: memref<1x1x1x128xf32, #tpu.memory_space<vmem>>, %arg8: memref<1x1x1x128xf32, #tpu.memory_space<vmem>>) attributes {dimension_semantics = [#tpu.dimension_semantics<parallel>, #tpu.dimension_semantics<parallel>], iteration_bounds = array<i64: 2, 2>, scalar_prefetch = 0 : i64, scratch_operands = 0 : i64, tpu.core_type = #tpu.core_type<tc>, window_params = [{transform_indices = @transform_0, window_bounds = array<i64: 1, 1, 10, 8, 12>}, {transform_indices = @transform_1, window_bounds = array<i64: 1, 1, 10, 8, 12>}, {pipeline_mode = #tpu.pipeline_mode<synchronous>, transform_indices = @transform_2, window_bounds = array<i64: 3, 12, 128>}, {transform_indices = @transform_3, window_bounds = array<i64: 1, 8, 8, 128>}, {transform_indices = @transform_4, window_bounds = array<i64: 1, 8, 8, 128>}, {transform_indices = @transform_5, window_bounds = array<i64: 1, 1, 1, 128>}, {transform_indices = @transform_6, window_bounds = array<i64: 1, 1, 1, 128>}]} {
    %cst = arith.constant 0.000000e+00 : f32
    %0 = vector.broadcast %cst : f32 to vector<64x128xf32>
    %c0 = arith.constant 0 : index
    %c0_0 = arith.constant 0 : index
    %c0_1 = arith.constant 0 : index
    %c0_2 = arith.constant 0 : index
    %c0_3 = arith.constant 0 : index
    %1 = vector.load %arg2[%c0, %c0_0, %c0_1, %c0_2, %c0_3] : memref<1x1x10x8x12xf32, #tpu.memory_space<vmem>>, vector<1x1x8x8x12xf32>
    %2 = vector.shape_cast %1 : vector<1x1x8x8x12xf32> to vector<8x8x12xf32>
    %3 = vector.shape_cast %2 : vector<8x8x12xf32> to vector<64x12xf32>
    %4 = arith.truncf %3 : vector<64x12xf32> to vector<64x12xbf16>
    %c0_4 = arith.constant 0 : index
    %c0_5 = arith.constant 0 : index
    %c0_6 = arith.constant 0 : index
    %5 = vector.load %arg4[%c0_4, %c0_5, %c0_6] : memref<3x12x128xbf16, #tpu.memory_space<vmem>>, vector<1x12x128xbf16>
    %6 = vector.shape_cast %5 : vector<1x12x128xbf16> to vector<12x128xbf16>
    %cst_7 = arith.constant dense<0.000000e+00> : vector<64x128xf32>
    %7 = tpu.matmul %4, %6, %cst_7 {dimension_numbers = #tpu.dot_dimension_numbers<[1], [0], [0], [1], [0, 0, 1, 1], [], []>} : vector<64x12xbf16>, vector<12x128xbf16>, vector<64x128xf32> -> vector<64x128xf32>
    %8 = arith.addf %0, %7 : vector<64x128xf32>
    %c0_8 = arith.constant 0 : index
    %c0_9 = arith.constant 0 : index
    %c1 = arith.constant 1 : index
    %c0_10 = arith.constant 0 : index
    %c0_11 = arith.constant 0 : index
    %9 = vector.load %arg2[%c0_8, %c0_9, %c1, %c0_10, %c0_11] : memref<1x1x10x8x12xf32, #tpu.memory_space<vmem>>, vector<1x1x8x8x12xf32>
    %10 = vector.shape_cast %9 : vector<1x1x8x8x12xf32> to vector<8x8x12xf32>
    %11 = vector.shape_cast %10 : vector<8x8x12xf32> to vector<64x12xf32>
    %12 = arith.truncf %11 : vector<64x12xf32> to vector<64x12xbf16>
    %c1_12 = arith.constant 1 : index
    %c0_13 = arith.constant 0 : index
    %c0_14 = arith.constant 0 : index
    %13 = vector.load %arg4[%c1_12, %c0_13, %c0_14] : memref<3x12x128xbf16, #tpu.memory_space<vmem>>, vector<1x12x128xbf16>
    %14 = vector.shape_cast %13 : vector<1x12x128xbf16> to vector<12x128xbf16>
    %cst_15 = arith.constant dense<0.000000e+00> : vector<64x128xf32>
    %15 = tpu.matmul %12, %14, %cst_15 {dimension_numbers = #tpu.dot_dimension_numbers<[1], [0], [0], [1], [0, 0, 1, 1], [], []>} : vector<64x12xbf16>, vector<12x128xbf16>, vector<64x128xf32> -> vector<64x128xf32>
    %16 = arith.addf %8, %15 : vector<64x128xf32>
    %c0_16 = arith.constant 0 : index
    %c0_17 = arith.constant 0 : index
    %c2 = arith.constant 2 : index
    %c0_18 = arith.constant 0 : index
    %c0_19 = arith.constant 0 : index
    %17 = vector.load %arg2[%c0_16, %c0_17, %c2, %c0_18, %c0_19] : memref<1x1x10x8x12xf32, #tpu.memory_space<vmem>>, vector<1x1x8x8x12xf32>
    %18 = vector.shape_cast %17 : vector<1x1x8x8x12xf32> to vector<8x8x12xf32>
    %19 = vector.shape_cast %18 : vector<8x8x12xf32> to vector<64x12xf32>
    %20 = arith.truncf %19 : vector<64x12xf32> to vector<64x12xbf16>
    %c2_20 = arith.constant 2 : index
    %c0_21 = arith.constant 0 : index
    %c0_22 = arith.constant 0 : index
    %21 = vector.load %arg4[%c2_20, %c0_21, %c0_22] : memref<3x12x128xbf16, #tpu.memory_space<vmem>>, vector<1x12x128xbf16>
    %22 = vector.shape_cast %21 : vector<1x12x128xbf16> to vector<12x128xbf16>
    %cst_23 = arith.constant dense<0.000000e+00> : vector<64x128xf32>
    %23 = tpu.matmul %20, %22, %cst_23 {dimension_numbers = #tpu.dot_dimension_numbers<[1], [0], [0], [1], [0, 0, 1, 1], [], []>} : vector<64x12xbf16>, vector<12x128xbf16>, vector<64x128xf32> -> vector<64x128xf32>
    %24 = arith.addf %16, %23 : vector<64x128xf32>
    %cst_24 = arith.constant 0.000000e+00 : f32
    %25 = vector.broadcast %cst_24 : f32 to vector<64x128xf32>
    %c0_25 = arith.constant 0 : index
    %c0_26 = arith.constant 0 : index
    %c0_27 = arith.constant 0 : index
    %c0_28 = arith.constant 0 : index
    %c0_29 = arith.constant 0 : index
    %26 = vector.load %arg3[%c0_25, %c0_26, %c0_27, %c0_28, %c0_29] : memref<1x1x10x8x12xf32, #tpu.memory_space<vmem>>, vector<1x1x8x8x12xf32>
    %27 = vector.shape_cast %26 : vector<1x1x8x8x12xf32> to vector<8x8x12xf32>
    %28 = vector.shape_cast %27 : vector<8x8x12xf32> to vector<64x12xf32>
    %29 = arith.truncf %28 : vector<64x12xf32> to vector<64x12xbf16>
    %c0_30 = arith.constant 0 : index
    %c0_31 = arith.constant 0 : index
    %c0_32 = arith.constant 0 : index
    %30 = vector.load %arg4[%c0_30, %c0_31, %c0_32] : memref<3x12x128xbf16, #tpu.memory_space<vmem>>, vector<1x12x128xbf16>
    %31 = vector.shape_cast %30 : vector<1x12x128xbf16> to vector<12x128xbf16>
    %cst_33 = arith.constant dense<0.000000e+00> : vector<64x128xf32>
    %32 = tpu.matmul %29, %31, %cst_33 {dimension_numbers = #tpu.dot_dimension_numbers<[1], [0], [0], [1], [0, 0, 1, 1], [], []>} : vector<64x12xbf16>, vector<12x128xbf16>, vector<64x128xf32> -> vector<64x128xf32>
    %33 = arith.addf %25, %32 : vector<64x128xf32>
    %c0_34 = arith.constant 0 : index
    %c0_35 = arith.constant 0 : index
    %c1_36 = arith.constant 1 : index
    %c0_37 = arith.constant 0 : index
    %c0_38 = arith.constant 0 : index
    %34 = vector.load %arg3[%c0_34, %c0_35, %c1_36, %c0_37, %c0_38] : memref<1x1x10x8x12xf32, #tpu.memory_space<vmem>>, vector<1x1x8x8x12xf32>
    %35 = vector.shape_cast %34 : vector<1x1x8x8x12xf32> to vector<8x8x12xf32>
    %36 = vector.shape_cast %35 : vector<8x8x12xf32> to vector<64x12xf32>
    %37 = arith.truncf %36 : vector<64x12xf32> to vector<64x12xbf16>
    %c1_39 = arith.constant 1 : index
    %c0_40 = arith.constant 0 : index
    %c0_41 = arith.constant 0 : index
    %38 = vector.load %arg4[%c1_39, %c0_40, %c0_41] : memref<3x12x128xbf16, #tpu.memory_space<vmem>>, vector<1x12x128xbf16>
    %39 = vector.shape_cast %38 : vector<1x12x128xbf16> to vector<12x128xbf16>
    %cst_42 = arith.constant dense<0.000000e+00> : vector<64x128xf32>
    %40 = tpu.matmul %37, %39, %cst_42 {dimension_numbers = #tpu.dot_dimension_numbers<[1], [0], [0], [1], [0, 0, 1, 1], [], []>} : vector<64x12xbf16>, vector<12x128xbf16>, vector<64x128xf32> -> vector<64x128xf32>
    %41 = arith.addf %33, %40 : vector<64x128xf32>
    %c0_43 = arith.constant 0 : index
    %c0_44 = arith.constant 0 : index
    %c2_45 = arith.constant 2 : index
    %c0_46 = arith.constant 0 : index
    %c0_47 = arith.constant 0 : index
    %42 = vector.load %arg3[%c0_43, %c0_44, %c2_45, %c0_46, %c0_47] : memref<1x1x10x8x12xf32, #tpu.memory_space<vmem>>, vector<1x1x8x8x12xf32>
    %43 = vector.shape_cast %42 : vector<1x1x8x8x12xf32> to vector<8x8x12xf32>
    %44 = vector.shape_cast %43 : vector<8x8x12xf32> to vector<64x12xf32>
    %45 = arith.truncf %44 : vector<64x12xf32> to vector<64x12xbf16>
    %c2_48 = arith.constant 2 : index
    %c0_49 = arith.constant 0 : index
    %c0_50 = arith.constant 0 : index
    %46 = vector.load %arg4[%c2_48, %c0_49, %c0_50] : memref<3x12x128xbf16, #tpu.memory_space<vmem>>, vector<1x12x128xbf16>
    %47 = vector.shape_cast %46 : vector<1x12x128xbf16> to vector<12x128xbf16>
    %cst_51 = arith.constant dense<0.000000e+00> : vector<64x128xf32>
    %48 = tpu.matmul %45, %47, %cst_51 {dimension_numbers = #tpu.dot_dimension_numbers<[1], [0], [0], [1], [0, 0, 1, 1], [], []>} : vector<64x12xbf16>, vector<12x128xbf16>, vector<64x128xf32> -> vector<64x128xf32>
    %49 = arith.addf %41, %48 : vector<64x128xf32>
    %cst_52 = arith.constant dense<0.000000e+00> : vector<128xf32>
    %50 = vector.multi_reduction <add>, %24, %cst_52 [0] : vector<64x128xf32> to vector<128xf32>
    %51 = vector.shape_cast %50 : vector<128xf32> to vector<1x128xf32>
    %cst_53 = arith.constant dense<0.000000e+00> : vector<128xf32>
    %52 = vector.multi_reduction <add>, %49, %cst_53 [0] : vector<64x128xf32> to vector<128xf32>
    %53 = vector.shape_cast %52 : vector<128xf32> to vector<1x128xf32>
    %54 = arith.addf %51, %53 : vector<1x128xf32>
    %c0_54 = arith.constant 0 : index
    %c0_55 = arith.constant 0 : index
    %c0_56 = arith.constant 0 : index
    %c0_57 = arith.constant 0 : index
    %55 = vector.load %arg7[%c0_54, %c0_55, %c0_56, %c0_57] : memref<1x1x1x128xf32, #tpu.memory_space<vmem>>, vector<1x1x1x128xf32>
    %56 = vector.shape_cast %55 : vector<1x1x1x128xf32> to vector<1x128xf32>
    %57 = vector.shape_cast %54 : vector<1x128xf32> to vector<1x1x1x128xf32>
    tpu.vector_store %arg7[%c0_54, %c0_55, %c0_56, %c0_57], %57 {strides = array<i32>} : memref<1x1x1x128xf32, #tpu.memory_space<vmem>>, vector<1x1x1x128xf32>,
    %58 = arith.mulf %24, %24 : vector<64x128xf32>
    %cst_58 = arith.constant dense<0.000000e+00> : vector<128xf32>
    %59 = vector.multi_reduction <add>, %58, %cst_58 [0] : vector<64x128xf32> to vector<128xf32>
    %60 = vector.shape_cast %59 : vector<128xf32> to vector<1x128xf32>
    %61 = arith.mulf %49, %49 : vector<64x128xf32>
    %cst_59 = arith.constant dense<0.000000e+00> : vector<128xf32>
    %62 = vector.multi_reduction <add>, %61, %cst_59 [0] : vector<64x128xf32> to vector<128xf32>
    %63 = vector.shape_cast %62 : vector<128xf32> to vector<1x128xf32>
    %64 = arith.addf %60, %63 : vector<1x128xf32>
    %c0_60 = arith.constant 0 : index
    %c0_61 = arith.constant 0 : index
    %c0_62 = arith.constant 0 : index
    %c0_63 = arith.constant 0 : index
    %65 = vector.load %arg8[%c0_60, %c0_61, %c0_62, %c0_63] : memref<1x1x1x128xf32, #tpu.memory_space<vmem>>, vector<1x1x1x128xf32>
    %66 = vector.shape_cast %65 : vector<1x1x1x128xf32> to vector<1x128xf32>
    %67 = vector.shape_cast %64 : vector<1x128xf32> to vector<1x1x1x128xf32>
    tpu.vector_store %arg8[%c0_60, %c0_61, %c0_62, %c0_63], %67 {strides = array<i32>} : memref<1x1x1x128xf32, #tpu.memory_space<vmem>>, vector<1x1x1x128xf32>,
    %68 = vector.shape_cast %24 : vector<64x128xf32> to vector<8x8x128xf32>
    %69 = arith.truncf %68 : vector<8x8x128xf32> to vector<8x8x128xbf16>
    %c0_64 = arith.constant 0 : index
    %c0_65 = arith.constant 0 : index
    %c0_66 = arith.constant 0 : index
    %c0_67 = arith.constant 0 : index
    %70 = vector.load %arg5[%c0_64, %c0_65, %c0_66, %c0_67] : memref<1x8x8x128xbf16, #tpu.memory_space<vmem>>, vector<1x8x8x128xbf16>
    %71 = vector.shape_cast %70 : vector<1x8x8x128xbf16> to vector<8x8x128xbf16>
    %72 = vector.shape_cast %69 : vector<8x8x128xbf16> to vector<1x8x8x128xbf16>
    tpu.vector_store %arg5[%c0_64, %c0_65, %c0_66, %c0_67], %72 {strides = array<i32>} : memref<1x8x8x128xbf16, #tpu.memory_space<vmem>>, vector<1x8x8x128xbf16>,
    %73 = vector.shape_cast %49 : vector<64x128xf32> to vector<8x8x128xf32>
    %74 = arith.truncf %73 : vector<8x8x128xf32> to vector<8x8x128xbf16>
    %c0_68 = arith.constant 0 : index
    %c0_69 = arith.constant 0 : index
    %c0_70 = arith.constant 0 : index
    %c0_71 = arith.constant 0 : index
    %75 = vector.load %arg6[%c0_68, %c0_69, %c0_70, %c0_71] : memref<1x8x8x128xbf16, #tpu.memory_space<vmem>>, vector<1x8x8x128xbf16>
    %76 = vector.shape_cast %75 : vector<1x8x8x128xbf16> to vector<8x8x128xbf16>
    %77 = vector.shape_cast %74 : vector<8x8x128xbf16> to vector<1x8x8x128xbf16>
    tpu.vector_store %arg6[%c0_68, %c0_69, %c0_70, %c0_71], %77 {strides = array<i32>} : memref<1x8x8x128xbf16, #tpu.memory_space<vmem>>, vector<1x8x8x128xbf16>,
    return
  }
  func.func @transform_0(%arg0: i32, %arg1: i32) -> (i32, i32, i32, i32, i32) {
    %c0_i32 = arith.constant 0 : i32
    %c0_i32_0 = arith.constant 0 : i32
    %c0_i32_1 = arith.constant 0 : i32
    %c0_i32_2 = arith.constant 0 : i32
    return %arg0, %arg1, %c0_i32, %c0_i32_0, %c0_i32_1 : i32, i32, i32, i32, i32
  }
  func.func @transform_1(%arg0: i32, %arg1: i32) -> (i32, i32, i32, i32, i32) {
    %c0_i32 = arith.constant 0 : i32
    %c0_i32_0 = arith.constant 0 : i32
    %c0_i32_1 = arith.constant 0 : i32
    %c0_i32_2 = arith.constant 0 : i32
    return %arg0, %arg1, %c0_i32, %c0_i32_0, %c0_i32_1 : i32, i32, i32, i32, i32
  }
  func.func @transform_2(%arg0: i32, %arg1: i32) -> (i32, i32, i32) {
    %c0_i32 = arith.constant 0 : i32
    %c0_i32_0 = arith.constant 0 : i32
    %c0_i32_1 = arith.constant 0 : i32
    %c0_i32_2 = arith.constant 0 : i32
    return %c0_i32, %c0_i32_0, %c0_i32_1 : i32, i32, i32
  }
  func.func @transform_3(%arg0: i32, %arg1: i32) -> (i32, i32, i32, i32) {
    %c0_i32 = arith.constant 0 : i32
    %c0_i32_0 = arith.constant 0 : i32
    %c0_i32_1 = arith.constant 0 : i32
    return %arg0, %arg1, %c0_i32, %c0_i32_0 : i32, i32, i32, i32
  }
  func.func @transform_4(%arg0: i32, %arg1: i32) -> (i32, i32, i32, i32) {
    %c0_i32 = arith.constant 0 : i32
    %c0_i32_0 = arith.constant 0 : i32
    %c0_i32_1 = arith.constant 0 : i32
    return %arg0, %arg1, %c0_i32, %c0_i32_0 : i32, i32, i32, i32
  }
  func.func @transform_5(%arg0: i32, %arg1: i32) -> (i32, i32, i32, i32) {
    %c0_i32 = arith.constant 0 : i32
    %c0_i32_0 = arith.constant 0 : i32
    %c0_i32_1 = arith.constant 0 : i32
    return %arg0, %arg1, %c0_i32, %c0_i32_0 : i32, i32, i32, i32
  }
  func.func @transform_6(%arg0: i32, %arg1: i32) -> (i32, i32, i32, i32) {
    %c0_i32 = arith.constant 0 : i32
    %c0_i32_0 = arith.constant 0 : i32
    %c0_i32_1 = arith.constant 0 : i32
    return %arg0, %arg1, %c0_i32, %c0_i32_0 : i32, i32, i32, i32
  }
}

module attributes {stable_mosaic.version = 11 : i64} {
  func.func @kernel(%arg0: i32, %arg1: i32, %arg2: memref<1x16x8x128xbf16, #tpu.memory_space<vmem>>, %arg3: memref<1x16x8x128xbf16, #tpu.memory_space<vmem>>, %arg4: memref<1x128xf32, #tpu.memory_space<vmem>>, %arg5: memref<1x128xf32, #tpu.memory_space<vmem>>, %arg6: memref<1x8x8x128xf32, #tpu.memory_space<vmem>>) attributes {dimension_semantics = [#tpu.dimension_semantics<parallel>, #tpu.dimension_semantics<parallel>], iteration_bounds = array<i64: 2, 1>, scalar_prefetch = 0 : i64, scratch_operands = 0 : i64, tpu.core_type = #tpu.core_type<tc>, window_params = [{transform_indices = @transform_0, window_bounds = array<i64: 1, 16, 8, 128>}, {transform_indices = @transform_1, window_bounds = array<i64: 1, 16, 8, 128>}, {pipeline_mode = #tpu.pipeline_mode<synchronous>, transform_indices = @transform_2, window_bounds = array<i64: 1, 128>}, {pipeline_mode = #tpu.pipeline_mode<synchronous>, transform_indices = @transform_3, window_bounds = array<i64: 1, 128>}, {transform_indices = @transform_4, window_bounds = array<i64: 1, 8, 8, 128>}]} {
    %c0 = arith.constant 0 : index
    %c0_0 = arith.constant 0 : index
    %0 = vector.load %arg4[%c0, %c0_0] : memref<1x128xf32, #tpu.memory_space<vmem>>, vector<1x128xf32>
    %c0_1 = arith.constant 0 : index
    %c0_2 = arith.constant 0 : index
    %1 = vector.load %arg5[%c0_1, %c0_2] : memref<1x128xf32, #tpu.memory_space<vmem>>, vector<1x128xf32>
    %c0_3 = arith.constant 0 : index
    %c0_4 = arith.constant 0 : index
    %c0_5 = arith.constant 0 : index
    %c0_6 = arith.constant 0 : index
    %2 = vector.load %arg2[%c0_3, %c0_4, %c0_5, %c0_6] : memref<1x16x8x128xbf16, #tpu.memory_space<vmem>>, vector<1x16x8x128xbf16>
    %3 = vector.shape_cast %2 : vector<1x16x8x128xbf16> to vector<16x8x128xbf16>
    %4 = arith.extf %3 : vector<16x8x128xbf16> to vector<16x8x128xf32>
    %5 = vector.shape_cast %0 : vector<1x128xf32> to vector<1x1x128xf32>
    %6 = vector.broadcast %5 : vector<1x1x128xf32> to vector<16x8x128xf32>
    %7 = arith.mulf %4, %6 : vector<16x8x128xf32>
    %8 = vector.shape_cast %1 : vector<1x128xf32> to vector<1x1x128xf32>
    %9 = vector.broadcast %8 : vector<1x1x128xf32> to vector<16x8x128xf32>
    %10 = arith.addf %7, %9 : vector<16x8x128xf32>
    %c0_7 = arith.constant 0 : index
    %c0_8 = arith.constant 0 : index
    %c0_9 = arith.constant 0 : index
    %c0_10 = arith.constant 0 : index
    %11 = vector.load %arg3[%c0_7, %c0_8, %c0_9, %c0_10] : memref<1x16x8x128xbf16, #tpu.memory_space<vmem>>, vector<1x16x8x128xbf16>
    %12 = vector.shape_cast %11 : vector<1x16x8x128xbf16> to vector<16x8x128xbf16>
    %13 = arith.extf %12 : vector<16x8x128xbf16> to vector<16x8x128xf32>
    %14 = vector.shape_cast %0 : vector<1x128xf32> to vector<1x1x128xf32>
    %15 = vector.broadcast %14 : vector<1x1x128xf32> to vector<16x8x128xf32>
    %16 = arith.mulf %13, %15 : vector<16x8x128xf32>
    %17 = vector.shape_cast %1 : vector<1x128xf32> to vector<1x1x128xf32>
    %18 = vector.broadcast %17 : vector<1x1x128xf32> to vector<16x8x128xf32>
    %19 = arith.addf %16, %18 : vector<16x8x128xf32>
    %20 = arith.maximumf %10, %19 : vector<16x8x128xf32>
    %cst = arith.constant 0.000000e+00 : f32
    %21 = vector.broadcast %cst : f32 to vector<16x8x128xf32>
    %22 = arith.maximumf %20, %21 : vector<16x8x128xf32>
    %23 = vector.shape_cast %22 : vector<16x8x128xf32> to vector<8x2x8x128xf32>
    %24 = vector.extract_strided_slice %23 {offsets = [0, 0, 0, 0], sizes = [8, 1, 8, 128], strides = [1, 1, 1, 1]} : vector<8x2x8x128xf32> to vector<8x1x8x128xf32>
    %25 = vector.shape_cast %24 : vector<8x1x8x128xf32> to vector<8x8x128xf32>
    %26 = vector.extract_strided_slice %23 {offsets = [0, 1, 0, 0], sizes = [8, 1, 8, 128], strides = [1, 1, 1, 1]} : vector<8x2x8x128xf32> to vector<8x1x8x128xf32>
    %27 = vector.shape_cast %26 : vector<8x1x8x128xf32> to vector<8x8x128xf32>
    %28 = arith.maximumf %25, %27 : vector<8x8x128xf32>
    %c0_11 = arith.constant 0 : index
    %c0_12 = arith.constant 0 : index
    %c0_13 = arith.constant 0 : index
    %c0_14 = arith.constant 0 : index
    %29 = vector.load %arg6[%c0_11, %c0_12, %c0_13, %c0_14] : memref<1x8x8x128xf32, #tpu.memory_space<vmem>>, vector<1x8x8x128xf32>
    %30 = vector.shape_cast %29 : vector<1x8x8x128xf32> to vector<8x8x128xf32>
    %31 = vector.shape_cast %28 : vector<8x8x128xf32> to vector<1x8x8x128xf32>
    tpu.vector_store %arg6[%c0_11, %c0_12, %c0_13, %c0_14], %31 {strides = array<i32>} : memref<1x8x8x128xf32, #tpu.memory_space<vmem>>, vector<1x8x8x128xf32>,
    return
  }
  func.func @transform_0(%arg0: i32, %arg1: i32) -> (i32, i32, i32, i32) {
    %c0_i32 = arith.constant 0 : i32
    %c0_i32_0 = arith.constant 0 : i32
    %c0_i32_1 = arith.constant 0 : i32
    return %arg0, %arg1, %c0_i32, %c0_i32_0 : i32, i32, i32, i32
  }
  func.func @transform_1(%arg0: i32, %arg1: i32) -> (i32, i32, i32, i32) {
    %c0_i32 = arith.constant 0 : i32
    %c0_i32_0 = arith.constant 0 : i32
    %c0_i32_1 = arith.constant 0 : i32
    return %arg0, %arg1, %c0_i32, %c0_i32_0 : i32, i32, i32, i32
  }
  func.func @transform_2(%arg0: i32, %arg1: i32) -> (i32, i32) {
    %c0_i32 = arith.constant 0 : i32
    %c0_i32_0 = arith.constant 0 : i32
    %c0_i32_1 = arith.constant 0 : i32
    return %c0_i32, %c0_i32_0 : i32, i32
  }
  func.func @transform_3(%arg0: i32, %arg1: i32) -> (i32, i32) {
    %c0_i32 = arith.constant 0 : i32
    %c0_i32_0 = arith.constant 0 : i32
    %c0_i32_1 = arith.constant 0 : i32
    return %c0_i32, %c0_i32_0 : i32, i32
  }
  func.func @transform_4(%arg0: i32, %arg1: i32) -> (i32, i32, i32, i32) {
    %c0_i32 = arith.constant 0 : i32
    %c0_i32_0 = arith.constant 0 : i32
    %c0_i32_1 = arith.constant 0 : i32
    return %arg0, %arg1, %c0_i32, %c0_i32_0 : i32, i32, i32, i32
  }
}

</mosaic_0001>

<llo_original>
// kernel: conv_block_forward.3
$region0: #{conv_block_forward.3}
  #allocation0 [shape = 'u32[]', space=smem, size = 0x4, offset = 0x4, fixed_abs, tag = 'smem constant byte address 0x4 - core index']
  #allocation1 [shape = 'u32[144,128]{1,0:T(1,128)}', space=vmem, size = 0x12000, scoped, tag = 'internal scratch']
  %s0 = inlined_call_operand.vmem [shape: bf16[2,16,8,128], index: 0, kind: input, shape index: {}]
  %s1 = inlined_call_operand.vmem [shape: bf16[2,16,8,128], index: 1, kind: input, shape index: {}]
  %s2 = inlined_call_operand.vmem [shape: f32[1,128], index: 2, kind: input, shape index: {}]
  %s3 = inlined_call_operand.vmem [shape: f32[1,128], index: 3, kind: input, shape index: {}]
  %s4 = inlined_call_operand.vmem [shape: f32[2,8,8,128], index: 4, kind: output, shape index: {}]
  %s5 = sld [smem:[#allocation0]]
  $region49: #{conv_block_forward.3} parent=0
    _
  %s7 = ssub.s32 1, %s5
  %s8 = scalar_select 0, %s7, %s5
  loop: start=0, step=1, limit=4
  $region2: #{conv_block_forward.3} parent=0 // loop_pre_header
    _
  $region3: #{conv_block_forward.3} parent=0 // loop_header
    %s10 = sphi 0, %s14
    %p11 = scmp.ge.s32.totalorder %s10, 4
    %s17 = sphi 0, %s29
    %s18 = sphi 0, %s25
    %s19 = sphi 0, %s17
    %s20 = sphi 0, %s18
    %s21 = sphi 0, %s19
    %s22 = sphi 0, %s20
    %s34 = sphi 0, %s36
    %s37 = sphi 0, %s34
    %s38 = sphi 0, %s37
    %s54 = sphi 0, %s38
    %s62 = sphi 0, %s64
    %s65 = sphi 0, %s62
    %s66 = sphi 0, %s65
    %s82 = sphi 0, %s66
    %s86 = sphi 0, %s86
    %s88 = sphi 0, %s86
    %s89 = sphi 0, %s88
    %s103 = sphi 0, %s89
    %s107 = sphi 0, %s107
    %s109 = sphi 0, %s107
    %s110 = sphi 0, %s109
    %s124 = sphi 0, %s110
    %s132 = sphi 0, %s134
    %s135 = sphi 0, %s132
    %s136 = sphi 0, %s135
    %s152 = sphi 0, %s136
  $region4: #{conv_block_forward.3} parent=0 // loop_header_branch
    %13 = sbr.rel (%p11) target = $region8
  $region5: #{conv_block_forward.3} parent=0 // loop_body
    %s15 = ssub.s32 %s10, 1
    %s16 = ssub.s32 %s10, 2
    %s23 = sadd.s32 1, %s18
    %p24 = scmp.ge.s32.totalorder %s23, 1
    %s25 = scalar_select %p24, 0, %s23
    %s26 = sadd.s32 1, %s17
    %s27 = scalar_select %p24, %s26, %s17
    %p28 = scmp.ge.s32.totalorder %s27, 2
    %s29 = scalar_select %p28, 0, %s27
    %s30 = ssub.s32 %s17, %s29
    %s31 = ssub.s32 %s18, %s25
    %s32 = sor.u32 %s30, %s31
    %p33 = scmp.eq.s32.totalorder %s32, 0
    %s35 = sadd.s32 %s34, 1
    %s36 = scalar_select %p33, %s34, %s35
    %p39 = pneg %p33
    %p40 = scmp.eq.s32.totalorder %s10, 1
    %p41 = por %p39, %p40
    %p42 = scmp.ne.s32.totalorder %s34, %s37
    %p43 = scmp.eq.s32.totalorder %s10, 0
    %p44 = por %p42, %p43
    %p45 = scmp.ne.s32.totalorder %s34, %s37
    %p46 = scmp.eq.s32.totalorder %s15, 1
    %p47 = por %p45, %p46
    %p48 = scmp.ne.s32.totalorder %s37, %s38
    %p49 = scmp.eq.s32.totalorder %s15, 0
    %p50 = por %p48, %p49
    %p51 = scmp.ne.s32.totalorder %s37, %s38
    %p52 = scmp.eq.s32.totalorder %s16, 1
    %p53 = por %p51, %p52
    %p55 = scmp.ne.s32.totalorder %s38, %s54
    %p56 = scmp.eq.s32.totalorder %s16, 0
    %p57 = por %p55, %p56
    %s58 = ssub.s32 %s17, %s29
    %s59 = ssub.s32 %s18, %s25
    %s60 = sor.u32 %s58, %s59
    %p61 = scmp.eq.s32.totalorder %s60, 0
    %s63 = sadd.s32 %s62, 1
    %s64 = scalar_select %p61, %s62, %s63
    %p67 = pneg %p61
    %p68 = scmp.eq.s32.totalorder %s10, 1
    %p69 = por %p67, %p68
    %p70 = scmp.ne.s32.totalorder %s62, %s65
    %p71 = scmp.eq.s32.totalorder %s10, 0
    %p72 = por %p70, %p71
    %p73 = scmp.ne.s32.totalorder %s62, %s65
    %p74 = scmp.eq.s32.totalorder %s15, 1
    %p75 = por %p73, %p74
    %p76 = scmp.ne.s32.totalorder %s65, %s66
    %p77 = scmp.eq.s32.totalorder %s15, 0
    %p78 = por %p76, %p77
    %p79 = scmp.ne.s32.totalorder %s65, %s66
    %p80 = scmp.eq.s32.totalorder %s16, 1
    %p81 = por %p79, %p80
    %p83 = scmp.ne.s32.totalorder %s66, %s82
    %p84 = scmp.eq.s32.totalorder %s16, 0
    %p85 = por %p83, %p84
    %s87 = sadd.s32 %s86, 1
    %p90 = scmp.eq.s32.totalorder %s10, 1
    %p91 = scmp.ne.s32.totalorder %s86, %s88
    %p92 = scmp.eq.s32.totalorder %s10, 0
    %p93 = por %p91, %p92
    %p94 = scmp.ne.s32.totalorder %s86, %s88
    %p95 = scmp.eq.s32.totalorder %s15, 1
    %p96 = por %p94, %p95
    %p97 = scmp.ne.s32.totalorder %s88, %s89
    %p98 = scmp.eq.s32.totalorder %s15, 0
    %p99 = por %p97, %p98
    %p100 = scmp.ne.s32.totalorder %s88, %s89
    %p101 = scmp.eq.s32.totalorder %s16, 1
    %p102 = por %p100, %p101
    %p104 = scmp.ne.s32.totalorder %s89, %s103
    %p105 = scmp.eq.s32.totalorder %s16, 0
    %p106 = por %p104, %p105
    %s108 = sadd.s32 %s107, 1
    %p111 = scmp.eq.s32.totalorder %s10, 1
    %p112 = scmp.ne.s32.totalorder %s107, %s109
    %p113 = scmp.eq.s32.totalorder %s10, 0
    %p114 = por %p112, %p113
    %p115 = scmp.ne.s32.totalorder %s107, %s109
    %p116 = scmp.eq.s32.totalorder %s15, 1
    %p117 = por %p115, %p116
    %p118 = scmp.ne.s32.totalorder %s109, %s110
    %p119 = scmp.eq.s32.totalorder %s15, 0
    %p120 = por %p118, %p119
    %p121 = scmp.ne.s32.totalorder %s109, %s110
    %p122 = scmp.eq.s32.totalorder %s16, 1
    %p123 = por %p121, %p122
    %p125 = scmp.ne.s32.totalorder %s110, %s124
    %p126 = scmp.eq.s32.totalorder %s16, 0
    %p127 = por %p125, %p126
    %s128 = ssub.s32 %s17, %s29
    %s129 = ssub.s32 %s18, %s25
    %s130 = sor.u32 %s128, %s129
    %p131 = scmp.eq.s32.totalorder %s130, 0
    %s133 = sadd.s32 %s132, 1
    %s134 = scalar_select %p131, %s132, %s133
    %p137 = pneg %p131
    %p138 = scmp.eq.s32.totalorder %s10, 1
    %p139 = por %p137, %p138
    %p140 = scmp.ne.s32.totalorder %s132, %s135
    %p141 = scmp.eq.s32.totalorder %s10, 0
    %p142 = por %p140, %p141
    %p143 = scmp.ne.s32.totalorder %s132, %s135
    %p144 = scmp.eq.s32.totalorder %s15, 1
    %p145 = por %p143, %p144
    %p146 = scmp.ne.s32.totalorder %s135, %s136
    %p147 = scmp.eq.s32.totalorder %s15, 0
    %p148 = por %p146, %p147
    %p149 = scmp.ne.s32.totalorder %s135, %s136
    %p150 = scmp.eq.s32.totalorder %s16, 1
    %p151 = por %p149, %p150
    %p153 = scmp.ne.s32.totalorder %s136, %s152
    %p154 = scmp.eq.s32.totalorder %s16, 0
    %p155 = por %p153, %p154
    %p156 = scmp.le.s32.totalorder 1, %s10
    %p157 = scmp.lt.s32.totalorder %s10, 3
    %p158 = pnand %p156, %p157
    %p159 = pneg %p158
    // Predicated region
    $region9: #{conv_block_forward.3} parent=5 // pred_check
      _
    $region10: #{conv_block_forward.3} parent=5 // pred_check_branch
      %161 = sbr.rel (%p158) target = $region12
    $region11: #{conv_block_forward.3} parent=5 // pred_region
      %s162 = ssub.s32 %s10, 1
      // Predicated region
      $region13: #{conv_block_forward.3} parent=11 // pred_check
        %p163 = pneg %p99
      $region14: #{conv_block_forward.3} parent=11 // pred_check_branch
        %165 = sbr.rel (%p163) target = $region16
      $region15: #{conv_block_forward.3} parent=11 // pred_region
        _
      $region16: #{conv_block_forward.3} parent=11 // pred_fallthru
        _
      // Predicated region
      $region17: #{conv_block_forward.3} parent=11 // pred_check
        %p166 = pneg %p120
      $region18: #{conv_block_forward.3} parent=11 // pred_check_branch
        %168 = sbr.rel (%p166) target = $region20
      $region19: #{conv_block_forward.3} parent=11 // pred_region
        _
      $region20: #{conv_block_forward.3} parent=11 // pred_fallthru
        _
    $region12: #{conv_block_forward.3} parent=5 // pred_fallthru
      _
    %p169 = scmp.lt.s32.totalorder %s10, 2
    // Predicated region
    $region21: #{conv_block_forward.3} parent=5 // pred_check
      %p170 = pneg %p169
    $region22: #{conv_block_forward.3} parent=5 // pred_check_branch
      %172 = sbr.rel (%p170) target = $region24
    $region23: #{conv_block_forward.3} parent=5 // pred_region
      // Predicated region
      $region25: #{conv_block_forward.3} parent=23 // pred_check
        %p173 = pneg %p44
      $region26: #{conv_block_forward.3} parent=23 // pred_check_branch
        %175 = sbr.rel (%p173) target = $region28
      $region27: #{conv_block_forward.3} parent=23 // pred_region
        %s176 = smul.u32 16, %s18
        %p177 = scmp.lt.s32.totalorder %s17, 1
        %s178 = scalar_select %p177, %s17, 1
        %p179 = scmp.lt.s32.totalorder %s176, 15
        %s180 = scalar_select %p179, %s176, 15
        %s181 = smul.addr %s178, 16
        %s182 = sadd.s32 %s180, %s181
        %s183 = smul.addr %s182, 4
        %s184 = scalar_lea.vmem %s0, %s183
        %s185 = smul.u32 16, %s18
      $region28: #{conv_block_forward.3} parent=23 // pred_fallthru
        _
      // Predicated region
      $region29: #{conv_block_forward.3} parent=23 // pred_check
        %p186 = pneg %p72
      $region30: #{conv_block_forward.3} parent=23 // pred_check_branch
        %188 = sbr.rel (%p186) target = $region32
      $region31: #{conv_block_forward.3} parent=23 // pred_region
        %s189 = smul.u32 16, %s18
        %p190 = scmp.lt.s32.totalorder %s17, 1
        %s191 = scalar_select %p190, %s17, 1
        %p192 = scmp.lt.s32.totalorder %s189, 15
        %s193 = scalar_select %p192, %s189, 15
        %s194 = smul.addr %s191, 16
        %s195 = sadd.s32 %s193, %s194
        %s196 = smul.addr %s195, 4
        %s197 = scalar_lea.vmem %s1, %s196
        %s198 = smul.u32 16, %s18
      $region32: #{conv_block_forward.3} parent=23 // pred_fallthru
        _
    $region24: #{conv_block_forward.3} parent=5 // pred_fallthru
      _
    %p199 = scmp.le.s32.totalorder 1, %s10
    %p200 = scmp.lt.s32.totalorder %s10, 3
    %p201 = pnand %p199, %p200
    %p202 = pneg %p201
    // Predicated region
    $region33: #{conv_block_forward.3} parent=5 // pred_check
      _
    $region34: #{conv_block_forward.3} parent=5 // pred_check_branch
      %204 = sbr.rel (%p201) target = $region36
    $region35: #{conv_block_forward.3} parent=5 // pred_region
      %s205 = ssub.s32 %s10, 1
      %s206 = smul.u32 16, %s20
      %p207 = scmp.lt.s32.totalorder %s19, 1
      %s208 = scalar_select %p207, %s19, 1
      %p209 = scmp.lt.s32.totalorder %s206, 15
      %s210 = scalar_select %p209, %s206, 15
      %s211 = smul.addr %s208, 16
      %s212 = sadd.s32 %s210, %s211
      %s213 = smul.addr %s212, 4
      %s214 = scalar_lea.vmem %s0, %s213
      %p215 = pneg %p50
      %p216 = pneg %p47
      %s217 = smul.u32 16, %s20
      %p218 = scmp.lt.s32.totalorder %s19, 1
      %s219 = scalar_select %p218, %s19, 1
      %p220 = scmp.lt.s32.totalorder %s217, 15
      %s221 = scalar_select %p220, %s217, 15
      %s222 = smul.addr %s219, 16
      %s223 = sadd.s32 %s221, %s222
      %s224 = smul.addr %s223, 4
      %s225 = scalar_lea.vmem %s1, %s224
      %p226 = pneg %p78
      %p227 = pneg %p75
      %p228 = pneg %p99
      %p229 = pneg %p96
      %p230 = pneg %p120
      %p231 = pneg %p117
      %p232 = pneg %p148
      %p233 = pneg %p145
      %s234 = smul.u32 8, %s20
      %p235 = scmp.lt.s32.totalorder %s19, 1
      %s236 = scalar_select %p235, %s19, 1
      %p237 = scmp.lt.s32.totalorder %s234, 7
      %s238 = scalar_select %p237, %s234, 7
      %s239 = smul.addr %s236, 8
      %s240 = sadd.s32 %s238, %s239
      %s241 = smul.addr %s240, 8
      %s242 = scalar_lea.vmem %s4, %s241
      %s243 = smul.u32 16, %s20
      %p244 = scmp.lt.s32.totalorder %s19, 1
      %s245 = scalar_select %p244, %s19, 1
      %p246 = scmp.lt.s32.totalorder %s243, 15
      %s247 = scalar_select %p246, %s243, 15
      %s248 = smul.addr %s245, 16
      %s249 = sadd.s32 %s247, %s248
      %s250 = smul.addr %s249, 4
      %s251 = scalar_lea.vmem %s0, %s250
      %s252 = smul.u32 16, %s20
      %s253 = smul.u32 16, %s20
      %p254 = scmp.lt.s32.totalorder %s19, 1
      %s255 = scalar_select %p254, %s19, 1
      %p256 = scmp.lt.s32.totalorder %s253, 15
      %s257 = scalar_select %p256, %s253, 15
      %s258 = smul.addr %s255, 16
      %s259 = sadd.s32 %s257, %s258
      %s260 = smul.addr %s259, 4
      %s261 = scalar_lea.vmem %s1, %s260
      %s262 = smul.u32 16, %s20
      %s263 = smul.u32 8, %s20
      %p264 = scmp.lt.s32.totalorder %s19, 1
      %s265 = scalar_select %p264, %s19, 1
      %p266 = scmp.lt.s32.totalorder %s263, 7
      %s267 = scalar_select %p266, %s263, 7
      %s268 = smul.addr %s265, 8
      %s269 = sadd.s32 %s267, %s268
      %s270 = smul.addr %s269, 8
      %s271 = scalar_lea.vmem %s4, %s270
      %s272 = smul.u32 8, %s20
      %v273 = vld [vmem:[%s2] sm:$0x1]
      %v274 = vld [vmem:[%s3] sm:$0x1]
      %v275 = vld [vmem:[%s251] sm:$0xf]
      %v276 = vld [vmem:[%s251 + $0x4] sm:$0xf]
      %v277 = vld [vmem:[%s251 + $0x8] sm:$0xf]
      %v278 = vld [vmem:[%s251 + $0xc] sm:$0xf]
      %v279 = vld [vmem:[%s251 + $0x10] sm:$0xf]
      %v280 = vld [vmem:[%s251 + $0x14] sm:$0xf]
      %v281 = vld [vmem:[%s251 + $0x18] sm:$0xf]
      %v282 = vld [vmem:[%s251 + $0x1c] sm:$0xf]
      %v283 = vld [vmem:[%s251 + $0x20] sm:$0xf]
      %v284 = vld [vmem:[%s251 + $0x24] sm:$0xf]
      %v285 = vld [vmem:[%s251 + $0x28] sm:$0xf]
      %v286 = vld [vmem:[%s251 + $0x2c] sm:$0xf]
      %v287 = vld [vmem:[%s251 + $0x30] sm:$0xf]
      %v288 = vld [vmem:[%s251 + $0x34] sm:$0xf]
      %v289 = vld [vmem:[%s251 + $0x38] sm:$0xf]
      %v290 = vld [vmem:[%s251 + $0x3c] sm:$0xf]
      %v291 = vunpack.c.l.bf16 %v275
      %v292 = vunpack.c.l.bf16 %v276
      %v293 = vunpack.c.l.bf16 %v277
      %v294 = vunpack.c.l.bf16 %v278
      %v295 = vunpack.c.l.bf16 %v279
      %v296 = vunpack.c.l.bf16 %v280
      %v297 = vunpack.c.l.bf16 %v281
      %v298 = vunpack.c.l.bf16 %v282
      %v299 = vunpack.c.l.bf16 %v283
      %v300 = vunpack.c.l.bf16 %v284
      %v301 = vunpack.c.l.bf16 %v285
      %v302 = vunpack.c.l.bf16 %v286
      %v303 = vunpack.c.l.bf16 %v287
      %v304 = vunpack.c.l.bf16 %v288
      %v305 = vunpack.c.l.bf16 %v289
      %v306 = vunpack.c.l.bf16 %v290
      %v308 = vlaneseq
      %v309 = vshrl.u32 %v308, 7
      %v310 = vsub.s32 0, %v309
      %v311 = vrot.slane %v273, %v310
      %v313 = vmul.f32 %v291, %v311
      %v314 = vmul.f32 %v292, %v311
      %v315 = vmul.f32 %v293, %v311
      %v316 = vmul.f32 %v294, %v311
      %v317 = vmul.f32 %v295, %v311
      %v318 = vmul.f32 %v296, %v311
      %v319 = vmul.f32 %v297, %v311
      %v320 = vmul.f32 %v298, %v311
      %v321 = vmul.f32 %v299, %v311
      %v322 = vmul.f32 %v300, %v311
      %v323 = vmul.f32 %v301, %v311
      %v324 = vmul.f32 %v302, %v311
      %v325 = vmul.f32 %v303, %v311
      %v326 = vmul.f32 %v304, %v311
      %v327 = vmul.f32 %v305, %v311
      %v328 = vmul.f32 %v306, %v311
      %v330 = vlaneseq
      %v331 = vshrl.u32 %v330, 7
      %v332 = vsub.s32 0, %v331
      %v333 = vrot.slane %v274, %v332
      %v335 = vadd.f32 %v313, %v333
      %v336 = vadd.f32 %v314, %v333
      %v337 = vadd.f32 %v315, %v333
      %v338 = vadd.f32 %v316, %v333
      %v339 = vadd.f32 %v317, %v333
      %v340 = vadd.f32 %v318, %v333
      %v341 = vadd.f32 %v319, %v333
      %v342 = vadd.f32 %v320, %v333
      %v343 = vadd.f32 %v321, %v333
      %v344 = vadd.f32 %v322, %v333
      %v345 = vadd.f32 %v323, %v333
      %v346 = vadd.f32 %v324, %v333
      %v347 = vadd.f32 %v325, %v333
      %v348 = vadd.f32 %v326, %v333
      %v349 = vadd.f32 %v327, %v333
      %v350 = vadd.f32 %v328, %v333
      %v351 = vld [vmem:[%s261] sm:$0xf]
      %v352 = vld [vmem:[%s261 + $0x4] sm:$0xf]
      %v353 = vld [vmem:[%s261 + $0x8] sm:$0xf]
      %v354 = vld [vmem:[%s261 + $0xc] sm:$0xf]
      %v355 = vld [vmem:[%s261 + $0x10] sm:$0xf]
      %v356 = vld [vmem:[%s261 + $0x14] sm:$0xf]
      %v357 = vld [vmem:[%s261 + $0x18] sm:$0xf]
      %v358 = vld [vmem:[%s261 + $0x1c] sm:$0xf]
      %v359 = vld [vmem:[%s261 + $0x20] sm:$0xf]
      %v360 = vld [vmem:[%s261 + $0x24] sm:$0xf]
      %v361 = vld [vmem:[%s261 + $0x28] sm:$0xf]
      %v362 = vld [vmem:[%s261 + $0x2c] sm:$0xf]
      %v363 = vld [vmem:[%s261 + $0x30] sm:$0xf]
      %v364 = vld [vmem:[%s261 + $0x34] sm:$0xf]
      %v365 = vld [vmem:[%s261 + $0x38] sm:$0xf]
      %v366 = vld [vmem:[%s261 + $0x3c] sm:$0xf]
      %v367 = vunpack.c.l.bf16 %v351
      %v368 = vunpack.c.l.bf16 %v352
      %v369 = vunpack.c.l.bf16 %v353
      %v370 = vunpack.c.l.bf16 %v354
      %v371 = vunpack.c.l.bf16 %v355
      %v372 = vunpack.c.l.bf16 %v356
      %v373 = vunpack.c.l.bf16 %v357
      %v374 = vunpack.c.l.bf16 %v358
      %v375 = vunpack.c.l.bf16 %v359
      %v376 = vunpack.c.l.bf16 %v360
      %v377 = vunpack.c.l.bf16 %v361
      %v378 = vunpack.c.l.bf16 %v362
      %v379 = vunpack.c.l.bf16 %v363
      %v380 = vunpack.c.l.bf16 %v364
      %v381 = vunpack.c.l.bf16 %v365
      %v382 = vunpack.c.l.bf16 %v366
      %v383 = vmul.f32 %v367, %v311
      %v384 = vmul.f32 %v368, %v311
      %v385 = vmul.f32 %v369, %v311
      %v386 = vmul.f32 %v370, %v311
      %v387 = vmul.f32 %v371, %v311
      %v388 = vmul.f32 %v372, %v311
      %v389 = vmul.f32 %v373, %v311
      %v390 = vmul.f32 %v374, %v311
      %v391 = vmul.f32 %v375, %v311
      %v392 = vmul.f32 %v376, %v311
      %v393 = vmul.f32 %v377, %v311
      %v394 = vmul.f32 %v378, %v311
      %v395 = vmul.f32 %v379, %v311
      %v396 = vmul.f32 %v380, %v311
      %v397 = vmul.f32 %v381, %v311
      %v398 = vmul.f32 %v382, %v311
      %v399 = vadd.f32 %v383, %v333
      %v400 = vadd.f32 %v384, %v333
      %v401 = vadd.f32 %v385, %v333
      %v402 = vadd.f32 %v386, %v333
      %v403 = vadd.f32 %v387, %v333
      %v404 = vadd.f32 %v388, %v333
      %v405 = vadd.f32 %v389, %v333
      %v406 = vadd.f32 %v390, %v333
      %v407 = vadd.f32 %v391, %v333
      %v408 = vadd.f32 %v392, %v333
      %v409 = vadd.f32 %v393, %v333
      %v410 = vadd.f32 %v394, %v333
      %v411 = vadd.f32 %v395, %v333
      %v412 = vadd.f32 %v396, %v333
      %v413 = vadd.f32 %v397, %v333
      %v414 = vadd.f32 %v398, %v333
      %v415 = vmax.f32 %v335, %v399
      %v416 = vmax.f32 %v336, %v400
      %v417 = vmax.f32 %v337, %v401
      %v418 = vmax.f32 %v338, %v402
      %v419 = vmax.f32 %v339, %v403
      %v420 = vmax.f32 %v340, %v404
      %v421 = vmax.f32 %v341, %v405
      %v422 = vmax.f32 %v342, %v406
      %v423 = vmax.f32 %v343, %v407
      %v424 = vmax.f32 %v344, %v408
      %v425 = vmax.f32 %v345, %v409
      %v426 = vmax.f32 %v346, %v410
      %v427 = vmax.f32 %v347, %v411
      %v428 = vmax.f32 %v348, %v412
      %v429 = vmax.f32 %v349, %v413
      %v430 = vmax.f32 %v350, %v414
      %v431 = vmax.f32 %v415, 0.0
      %v432 = vmax.f32 %v416, 0.0
      %v433 = vmax.f32 %v417, 0.0
      %v434 = vmax.f32 %v418, 0.0
      %v435 = vmax.f32 %v419, 0.0
      %v436 = vmax.f32 %v420, 0.0
      %v437 = vmax.f32 %v421, 0.0
      %v438 = vmax.f32 %v422, 0.0
      %v439 = vmax.f32 %v423, 0.0
      %v440 = vmax.f32 %v424, 0.0
      %v441 = vmax.f32 %v425, 0.0
      %v442 = vmax.f32 %v426, 0.0
      %v443 = vmax.f32 %v427, 0.0
      %v444 = vmax.f32 %v428, 0.0
      %v445 = vmax.f32 %v429, 0.0
      %v446 = vmax.f32 %v430, 0.0
      %v447 = vmax.f32 %v431, %v432
      %v448 = vmax.f32 %v433, %v434
      %v449 = vmax.f32 %v435, %v436
      %v450 = vmax.f32 %v437, %v438
      %v451 = vmax.f32 %v439, %v440
      %v452 = vmax.f32 %v441, %v442
      %v453 = vmax.f32 %v443, %v444
      %v454 = vmax.f32 %v445, %v446
      %455 = vst [vmem:[%s271] sm:$0xff] %v447
      %456 = vst [vmem:[%s271 + $0x8] sm:$0xff] %v448
      %457 = vst [vmem:[%s271 + $0x10] sm:$0xff] %v449
      %458 = vst [vmem:[%s271 + $0x18] sm:$0xff] %v450
      %459 = vst [vmem:[%s271 + $0x20] sm:$0xff] %v451
      %460 = vst [vmem:[%s271 + $0x28] sm:$0xff] %v452
      %461 = vst [vmem:[%s271 + $0x30] sm:$0xff] %v453
      %462 = vst [vmem:[%s271 + $0x38] sm:$0xff] %v454
      %s463 = smul.u32 8, %s20
      %p464 = scmp.lt.s32.totalorder %s19, 1
      %s465 = scalar_select %p464, %s19, 1
      %p466 = scmp.lt.s32.totalorder %s463, 7
      %s467 = scalar_select %p466, %s463, 7
      %s468 = smul.addr %s465, 8
      %s469 = sadd.s32 %s467, %s468
      %s470 = smul.addr %s469, 8
      %s471 = scalar_lea.vmem %s4, %s470
      // Predicated region
      $region37: #{conv_block_forward.3} parent=35 // pred_check
        %p472 = pneg %p145
      $region38: #{conv_block_forward.3} parent=35 // pred_check_branch
        %474 = sbr.rel (%p472) target = $region40
      $region39: #{conv_block_forward.3} parent=35 // pred_region
        %s475 = smul.u32 8, %s20
      $region40: #{conv_block_forward.3} parent=35 // pred_fallthru
        _
    $region36: #{conv_block_forward.3} parent=5 // pred_fallthru
      _
    %p476 = scmp.le.s32.totalorder 2, %s10
    // Predicated region
    $region41: #{conv_block_forward.3} parent=5 // pred_check
      %p477 = pneg %p476
    $region42: #{conv_block_forward.3} parent=5 // pred_check_branch
      %479 = sbr.rel (%p477) target = $region44
    $region43: #{conv_block_forward.3} parent=5 // pred_region
      %s480 = ssub.s32 %s10, 2
      // Predicated region
      $region45: #{conv_block_forward.3} parent=43 // pred_check
        %p481 = pneg %p151
      $region46: #{conv_block_forward.3} parent=43 // pred_check_branch
        %483 = sbr.rel (%p481) target = $region48
      $region47: #{conv_block_forward.3} parent=43 // pred_region
        %s484 = smul.u32 8, %s22
        %p485 = scmp.lt.s32.totalorder %s21, 1
        %s486 = scalar_select %p485, %s21, 1
        %p487 = scmp.lt.s32.totalorder %s484, 7
        %s488 = scalar_select %p487, %s484, 7
        %s489 = smul.addr %s486, 8
        %s490 = sadd.s32 %s488, %s489
        %s491 = smul.addr %s490, 8
        %s492 = scalar_lea.vmem %s4, %s491
      $region48: #{conv_block_forward.3} parent=43 // pred_fallthru
        _
    $region44: #{conv_block_forward.3} parent=5 // pred_fallthru
      _
  $region6: #{conv_block_forward.3} parent=0 // loop_footer
    %s14 = sadd.s32 1, %s10
  $region7: #{conv_block_forward.3} parent=0 // loop_footer_branch
    %9 = sbr.rel target = $region3
  $region8: #{conv_block_forward.3} parent=0 // loop_exit
    _

// kernel: conv_block_forward.2
$region0: #{conv_block_forward.2}
  #allocation0 [shape = 'u32[]', space=smem, size = 0x4, offset = 0x4, fixed_abs, tag = 'smem constant byte address 0x4 - core index']
  #allocation1 [shape = 'u32[144,128]{1,0:T(1,128)}', space=vmem, size = 0x12000, scoped, tag = 'internal scratch']
  %s0 = inlined_call_operand.vmem [shape: f32[2,2,10,8,12], index: 0, kind: input, shape index: {}]
  %s1 = inlined_call_operand.vmem [shape: f32[2,2,10,8,12], index: 1, kind: input, shape index: {}]
  %s2 = inlined_call_operand.vmem [shape: bf16[3,12,128], index: 2, kind: input, shape index: {}]
  %s3 = inlined_call_operand.vmem [shape: bf16[2,16,8,128], index: 3, kind: output, shape index: {0}]
  %s4 = inlined_call_operand.vmem [shape: bf16[2,16,8,128], index: 4, kind: output, shape index: {1}]
  %s5 = inlined_call_operand.vmem [shape: f32[2,2,1,128], index: 5, kind: output, shape index: {2}]
  %s6 = inlined_call_operand.vmem [shape: f32[2,2,1,128], index: 6, kind: output, shape index: {3}]
  %7 = xla_tuple %s3, %s4, %s5, %s6
  %s8 = sld [smem:[#allocation0]]
  $region69: #{conv_block_forward.2} parent=0
    _
  %s10 = ssub.s32 1, %s8
  %s11 = scalar_select 0, %s10, %s8
  loop: start=0, step=1, limit=6
  $region2: #{conv_block_forward.2} parent=0 // loop_pre_header
    _
  $region3: #{conv_block_forward.2} parent=0 // loop_header
    %s13 = sphi 0, %s17
    %p14 = scmp.ge.s32.totalorder %s13, 6
    %s20 = sphi 0, %s32
    %s21 = sphi 0, %s28
    %s22 = sphi 0, %s20
    %s23 = sphi 0, %s21
    %s24 = sphi 0, %s22
    %s25 = sphi 0, %s23
    %s37 = sphi 0, %s39
    %s40 = sphi 0, %s37
    %s41 = sphi 0, %s40
    %s57 = sphi 0, %s41
    %s65 = sphi 0, %s67
    %s68 = sphi 0, %s65
    %s69 = sphi 0, %s68
    %s85 = sphi 0, %s69
    %s89 = sphi 0, %s89
    %s91 = sphi 0, %s89
    %s92 = sphi 0, %s91
    %s106 = sphi 0, %s92
    %s114 = sphi 0, %s116
    %s117 = sphi 0, %s114
    %s118 = sphi 0, %s117
    %s134 = sphi 0, %s118
    %s142 = sphi 0, %s144
    %s145 = sphi 0, %s142
    %s146 = sphi 0, %s145
    %s162 = sphi 0, %s146
    %s170 = sphi 0, %s172
    %s173 = sphi 0, %s170
    %s174 = sphi 0, %s173
    %s190 = sphi 0, %s174
    %s198 = sphi 0, %s200
    %s201 = sphi 0, %s198
    %s202 = sphi 0, %s201
    %s218 = sphi 0, %s202
  $region4: #{conv_block_forward.2} parent=0 // loop_header_branch
    %16 = sbr.rel (%p14) target = $region8
  $region5: #{conv_block_forward.2} parent=0 // loop_body
    %s18 = ssub.s32 %s13, 1
    %s19 = ssub.s32 %s13, 2
    %s26 = sadd.s32 1, %s21
    %p27 = scmp.ge.s32.totalorder %s26, 2
    %s28 = scalar_select %p27, 0, %s26
    %s29 = sadd.s32 1, %s20
    %s30 = scalar_select %p27, %s29, %s20
    %p31 = scmp.ge.s32.totalorder %s30, 2
    %s32 = scalar_select %p31, 0, %s30
    %s33 = ssub.s32 %s20, %s32
    %s34 = ssub.s32 %s21, %s28
    %s35 = sor.u32 %s33, %s34
    %p36 = scmp.eq.s32.totalorder %s35, 0
    %s38 = sadd.s32 %s37, 1
    %s39 = scalar_select %p36, %s37, %s38
    %p42 = pneg %p36
    %p43 = scmp.eq.s32.totalorder %s13, 3
    %p44 = por %p42, %p43
    %p45 = scmp.ne.s32.totalorder %s37, %s40
    %p46 = scmp.eq.s32.totalorder %s13, 0
    %p47 = por %p45, %p46
    %p48 = scmp.ne.s32.totalorder %s37, %s40
    %p49 = scmp.eq.s32.totalorder %s18, 3
    %p50 = por %p48, %p49
    %p51 = scmp.ne.s32.totalorder %s40, %s41
    %p52 = scmp.eq.s32.totalorder %s18, 0
    %p53 = por %p51, %p52
    %p54 = scmp.ne.s32.totalorder %s40, %s41
    %p55 = scmp.eq.s32.totalorder %s19, 3
    %p56 = por %p54, %p55
    %p58 = scmp.ne.s32.totalorder %s41, %s57
    %p59 = scmp.eq.s32.totalorder %s19, 0
    %p60 = por %p58, %p59
    %s61 = ssub.s32 %s20, %s32
    %s62 = ssub.s32 %s21, %s28
    %s63 = sor.u32 %s61, %s62
    %p64 = scmp.eq.s32.totalorder %s63, 0
    %s66 = sadd.s32 %s65, 1
    %s67 = scalar_select %p64, %s65, %s66
    %p70 = pneg %p64
    %p71 = scmp.eq.s32.totalorder %s13, 3
    %p72 = por %p70, %p71
    %p73 = scmp.ne.s32.totalorder %s65, %s68
    %p74 = scmp.eq.s32.totalorder %s13, 0
    %p75 = por %p73, %p74
    %p76 = scmp.ne.s32.totalorder %s65, %s68
    %p77 = scmp.eq.s32.totalorder %s18, 3
    %p78 = por %p76, %p77
    %p79 = scmp.ne.s32.totalorder %s68, %s69
    %p80 = scmp.eq.s32.totalorder %s18, 0
    %p81 = por %p79, %p80
    %p82 = scmp.ne.s32.totalorder %s68, %s69
    %p83 = scmp.eq.s32.totalorder %s19, 3
    %p84 = por %p82, %p83
    %p86 = scmp.ne.s32.totalorder %s69, %s85
    %p87 = scmp.eq.s32.totalorder %s19, 0
    %p88 = por %p86, %p87
    %s90 = sadd.s32 %s89, 1
    %p93 = scmp.eq.s32.totalorder %s13, 3
    %p94 = scmp.ne.s32.totalorder %s89, %s91
    %p95 = scmp.eq.s32.totalorder %s13, 0
    %p96 = por %p94, %p95
    %p97 = scmp.ne.s32.totalorder %s89, %s91
    %p98 = scmp.eq.s32.totalorder %s18, 3
    %p99 = por %p97, %p98
    %p100 = scmp.ne.s32.totalorder %s91, %s92
    %p101 = scmp.eq.s32.totalorder %s18, 0
    %p102 = por %p100, %p101
    %p103 = scmp.ne.s32.totalorder %s91, %s92
    %p104 = scmp.eq.s32.totalorder %s19, 3
    %p105 = por %p103, %p104
    %p107 = scmp.ne.s32.totalorder %s92, %s106
    %p108 = scmp.eq.s32.totalorder %s19, 0
    %p109 = por %p107, %p108
    %s110 = ssub.s32 %s20, %s32
    %s111 = ssub.s32 %s21, %s28
    %s112 = sor.u32 %s110, %s111
    %p113 = scmp.eq.s32.totalorder %s112, 0
    %s115 = sadd.s32 %s114, 1
    %s116 = scalar_select %p113, %s114, %s115
    %p119 = pneg %p113
    %p120 = scmp.eq.s32.totalorder %s13, 3
    %p121 = por %p119, %p120
    %p122 = scmp.ne.s32.totalorder %s114, %s117
    %p123 = scmp.eq.s32.totalorder %s13, 0
    %p124 = por %p122, %p123
    %p125 = scmp.ne.s32.totalorder %s114, %s117
    %p126 = scmp.eq.s32.totalorder %s18, 3
    %p127 = por %p125, %p126
    %p128 = scmp.ne.s32.totalorder %s117, %s118
    %p129 = scmp.eq.s32.totalorder %s18, 0
    %p130 = por %p128, %p129
    %p131 = scmp.ne.s32.totalorder %s117, %s118
    %p132 = scmp.eq.s32.totalorder %s19, 3
    %p133 = por %p131, %p132
    %p135 = scmp.ne.s32.totalorder %s118, %s134
    %p136 = scmp.eq.s32.totalorder %s19, 0
    %p137 = por %p135, %p136
    %s138 = ssub.s32 %s20, %s32
    %s139 = ssub.s32 %s21, %s28
    %s140 = sor.u32 %s138, %s139
    %p141 = scmp.eq.s32.totalorder %s140, 0
    %s143 = sadd.s32 %s142, 1
    %s144 = scalar_select %p141, %s142, %s143
    %p147 = pneg %p141
    %p148 = scmp.eq.s32.totalorder %s13, 3
    %p149 = por %p147, %p148
    %p150 = scmp.ne.s32.totalorder %s142, %s145
    %p151 = scmp.eq.s32.totalorder %s13, 0
    %p152 = por %p150, %p151
    %p153 = scmp.ne.s32.totalorder %s142, %s145
    %p154 = scmp.eq.s32.totalorder %s18, 3
    %p155 = por %p153, %p154
    %p156 = scmp.ne.s32.totalorder %s145, %s146
    %p157 = scmp.eq.s32.totalorder %s18, 0
    %p158 = por %p156, %p157
    %p159 = scmp.ne.s32.totalorder %s145, %s146
    %p160 = scmp.eq.s32.totalorder %s19, 3
    %p161 = por %p159, %p160
    %p163 = scmp.ne.s32.totalorder %s146, %s162
    %p164 = scmp.eq.s32.totalorder %s19, 0
    %p165 = por %p163, %p164
    %s166 = ssub.s32 %s20, %s32
    %s167 = ssub.s32 %s21, %s28
    %s168 = sor.u32 %s166, %s167
    %p169 = scmp.eq.s32.totalorder %s168, 0
    %s171 = sadd.s32 %s170, 1
    %s172 = scalar_select %p169, %s170, %s171
    %p175 = pneg %p169
    %p176 = scmp.eq.s32.totalorder %s13, 3
    %p177 = por %p175, %p176
    %p178 = scmp.ne.s32.totalorder %s170, %s173
    %p179 = scmp.eq.s32.totalorder %s13, 0
    %p180 = por %p178, %p179
    %p181 = scmp.ne.s32.totalorder %s170, %s173
    %p182 = scmp.eq.s32.totalorder %s18, 3
    %p183 = por %p181, %p182
    %p184 = scmp.ne.s32.totalorder %s173, %s174
    %p185 = scmp.eq.s32.totalorder %s18, 0
    %p186 = por %p184, %p185
    %p187 = scmp.ne.s32.totalorder %s173, %s174
    %p188 = scmp.eq.s32.totalorder %s19, 3
    %p189 = por %p187, %p188
    %p191 = scmp.ne.s32.totalorder %s174, %s190
    %p192 = scmp.eq.s32.totalorder %s19, 0
    %p193 = por %p191, %p192
    %s194 = ssub.s32 %s20, %s32
    %s195 = ssub.s32 %s21, %s28
    %s196 = sor.u32 %s194, %s195
    %p197 = scmp.eq.s32.totalorder %s196, 0
    %s199 = sadd.s32 %s198, 1
    %s200 = scalar_select %p197, %s198, %s199
    %p203 = pneg %p197
    %p204 = scmp.eq.s32.totalorder %s13, 3
    %p205 = por %p203, %p204
    %p206 = scmp.ne.s32.totalorder %s198, %s201
    %p207 = scmp.eq.s32.totalorder %s13, 0
    %p208 = por %p206, %p207
    %p209 = scmp.ne.s32.totalorder %s198, %s201
    %p210 = scmp.eq.s32.totalorder %s18, 3
    %p211 = por %p209, %p210
    %p212 = scmp.ne.s32.totalorder %s201, %s202
    %p213 = scmp.eq.s32.totalorder %s18, 0
    %p214 = por %p212, %p213
    %p215 = scmp.ne.s32.totalorder %s201, %s202
    %p216 = scmp.eq.s32.totalorder %s19, 3
    %p217 = por %p215, %p216
    %p219 = scmp.ne.s32.totalorder %s202, %s218
    %p220 = scmp.eq.s32.totalorder %s19, 0
    %p221 = por %p219, %p220
    %p222 = scmp.le.s32.totalorder 1, %s13
    %p223 = scmp.lt.s32.totalorder %s13, 5
    %p224 = pnand %p222, %p223
    %p225 = pneg %p224
    // Predicated region
    $region9: #{conv_block_forward.2} parent=5 // pred_check
      _
    $region10: #{conv_block_forward.2} parent=5 // pred_check_branch
      %227 = sbr.rel (%p224) target = $region12
    $region11: #{conv_block_forward.2} parent=5 // pred_region
      %s228 = ssub.s32 %s13, 1
      // Predicated region
      $region13: #{conv_block_forward.2} parent=11 // pred_check
        %p229 = pneg %p102
      $region14: #{conv_block_forward.2} parent=11 // pred_check_branch
        %231 = sbr.rel (%p229) target = $region16
      $region15: #{conv_block_forward.2} parent=11 // pred_region
        _
      $region16: #{conv_block_forward.2} parent=11 // pred_fallthru
        _
    $region12: #{conv_block_forward.2} parent=5 // pred_fallthru
      _
    %p232 = scmp.lt.s32.totalorder %s13, 4
    // Predicated region
    $region17: #{conv_block_forward.2} parent=5 // pred_check
      %p233 = pneg %p232
    $region18: #{conv_block_forward.2} parent=5 // pred_check_branch
      %235 = sbr.rel (%p233) target = $region20
    $region19: #{conv_block_forward.2} parent=5 // pred_region
      // Predicated region
      $region21: #{conv_block_forward.2} parent=19 // pred_check
        %p236 = pneg %p47
      $region22: #{conv_block_forward.2} parent=19 // pred_check_branch
        %238 = sbr.rel (%p236) target = $region24
      $region23: #{conv_block_forward.2} parent=19 // pred_region
        %p239 = scmp.lt.s32.totalorder %s20, 1
        %s240 = scalar_select %p239, %s20, 1
        %p241 = scmp.lt.s32.totalorder %s21, 1
        %s242 = scalar_select %p241, %s21, 1
        %s243 = smul.addr %s242, 10
        %s244 = smul.addr %s240, 20
        %s245 = sadd.s32 %s243, %s244
        %s246 = smul.addr %s245, 8
        %s247 = scalar_lea.vmem %s0, %s246
      $region24: #{conv_block_forward.2} parent=19 // pred_fallthru
        _
      // Predicated region
      $region25: #{conv_block_forward.2} parent=19 // pred_check
        %p248 = pneg %p75
      $region26: #{conv_block_forward.2} parent=19 // pred_check_branch
        %250 = sbr.rel (%p248) target = $region28
      $region27: #{conv_block_forward.2} parent=19 // pred_region
        %p251 = scmp.lt.s32.totalorder %s20, 1
        %s252 = scalar_select %p251, %s20, 1
        %p253 = scmp.lt.s32.totalorder %s21, 1
        %s254 = scalar_select %p253, %s21, 1
        %s255 = smul.addr %s254, 10
        %s256 = smul.addr %s252, 20
        %s257 = sadd.s32 %s255, %s256
        %s258 = smul.addr %s257, 8
        %s259 = scalar_lea.vmem %s1, %s258
      $region28: #{conv_block_forward.2} parent=19 // pred_fallthru
        _
    $region20: #{conv_block_forward.2} parent=5 // pred_fallthru
      _
    %p260 = scmp.le.s32.totalorder 1, %s13
    %p261 = scmp.lt.s32.totalorder %s13, 5
    %p262 = pnand %p260, %p261
    %p263 = pneg %p262
    // Predicated region
    $region29: #{conv_block_forward.2} parent=5 // pred_check
      _
    $region30: #{conv_block_forward.2} parent=5 // pred_check_branch
      %265 = sbr.rel (%p262) target = $region32
    $region31: #{conv_block_forward.2} parent=5 // pred_region
      %s266 = ssub.s32 %s13, 1
      %p267 = scmp.lt.s32.totalorder %s22, 1
      %s268 = scalar_select %p267, %s22, 1
      %p269 = scmp.lt.s32.totalorder %s23, 1
      %s270 = scalar_select %p269, %s23, 1
      %s271 = smul.addr %s270, 10
      %s272 = smul.addr %s268, 20
      %s273 = sadd.s32 %s271, %s272
      %s274 = smul.addr %s273, 8
      %s275 = scalar_lea.vmem %s0, %s274
      %p276 = pneg %p53
      %p277 = pneg %p50
      %p278 = scmp.lt.s32.totalorder %s22, 1
      %s279 = scalar_select %p278, %s22, 1
      %p280 = scmp.lt.s32.totalorder %s23, 1
      %s281 = scalar_select %p280, %s23, 1
      %s282 = smul.addr %s281, 10
      %s283 = smul.addr %s279, 20
      %s284 = sadd.s32 %s282, %s283
      %s285 = smul.addr %s284, 8
      %s286 = scalar_lea.vmem %s1, %s285
      %p287 = pneg %p81
      %p288 = pneg %p78
      %p289 = pneg %p102
      %p290 = pneg %p99
      %p291 = pneg %p130
      %p292 = pneg %p127
      %s293 = smul.u32 8, %s23
      %p294 = scmp.lt.s32.totalorder %s22, 1
      %s295 = scalar_select %p294, %s22, 1
      %p296 = scmp.lt.s32.totalorder %s293, 15
      %s297 = scalar_select %p296, %s293, 15
      %s298 = smul.addr %s295, 16
      %s299 = sadd.s32 %s297, %s298
      %s300 = smul.addr %s299, 4
      %s301 = scalar_lea.vmem %s3, %s300
      %p302 = pneg %p158
      %p303 = pneg %p155
      %s304 = smul.u32 8, %s23
      %p305 = scmp.lt.s32.totalorder %s22, 1
      %s306 = scalar_select %p305, %s22, 1
      %p307 = scmp.lt.s32.totalorder %s304, 15
      %s308 = scalar_select %p307, %s304, 15
      %s309 = smul.addr %s306, 16
      %s310 = sadd.s32 %s308, %s309
      %s311 = smul.addr %s310, 4
      %s312 = scalar_lea.vmem %s4, %s311
      %p313 = pneg %p186
      %p314 = pneg %p183
      %p315 = scmp.lt.s32.totalorder %s22, 1
      %s316 = scalar_select %p315, %s22, 1
      %p317 = scmp.lt.s32.totalorder %s23, 1
      %s318 = scalar_select %p317, %s23, 1
      %s319 = smul.addr %s316, 2
      %s320 = sadd.s32 %s318, %s319
      %s321 = scalar_lea.vmem %s5, %s320
      %p322 = pneg %p214
      %p323 = pneg %p211
      %p324 = scmp.lt.s32.totalorder %s22, 1
      %s325 = scalar_select %p324, %s22, 1
      %p326 = scmp.lt.s32.totalorder %s23, 1
      %s327 = scalar_select %p326, %s23, 1
      %s328 = smul.addr %s325, 2
      %s329 = sadd.s32 %s327, %s328
      %s330 = scalar_lea.vmem %s6, %s329
      %p331 = scmp.lt.s32.totalorder %s22, 1
      %s332 = scalar_select %p331, %s22, 1
      %p333 = scmp.lt.s32.totalorder %s23, 1
      %s334 = scalar_select %p333, %s23, 1
      %s335 = smul.addr %s334, 10
      %s336 = smul.addr %s332, 20
      %s337 = sadd.s32 %s335, %s336
      %s338 = smul.addr %s337, 8
      %s339 = scalar_lea.vmem %s0, %s338
      %p340 = scmp.lt.s32.totalorder %s22, 1
      %s341 = scalar_select %p340, %s22, 1
      %p342 = scmp.lt.s32.totalorder %s23, 1
      %s343 = scalar_select %p342, %s23, 1
      %s344 = smul.addr %s343, 10
      %s345 = smul.addr %s341, 20
      %s346 = sadd.s32 %s344, %s345
      %s347 = smul.addr %s346, 8
      %s348 = scalar_lea.vmem %s1, %s347
      %s349 = smul.u32 8, %s23
      %p350 = scmp.lt.s32.totalorder %s22, 1
      %s351 = scalar_select %p350, %s22, 1
      %p352 = scmp.lt.s32.totalorder %s349, 15
      %s353 = scalar_select %p352, %s349, 15
      %s354 = smul.addr %s351, 16
      %s355 = sadd.s32 %s353, %s354
      %s356 = smul.addr %s355, 4
      %s357 = scalar_lea.vmem %s3, %s356
      %s358 = smul.u32 8, %s23
      %s359 = smul.u32 8, %s23
      %p360 = scmp.lt.s32.totalorder %s22, 1
      %s361 = scalar_select %p360, %s22, 1
      %p362 = scmp.lt.s32.totalorder %s359, 15
      %s363 = scalar_select %p362, %s359, 15
      %s364 = smul.addr %s361, 16
      %s365 = sadd.s32 %s363, %s364
      %s366 = smul.addr %s365, 4
      %s367 = scalar_lea.vmem %s4, %s366
      %s368 = smul.u32 8, %s23
      %p369 = scmp.lt.s32.totalorder %s22, 1
      %s370 = scalar_select %p369, %s22, 1
      %p371 = scmp.lt.s32.totalorder %s23, 1
      %s372 = scalar_select %p371, %s23, 1
      %s373 = smul.addr %s370, 2
      %s374 = sadd.s32 %s372, %s373
      %s375 = scalar_lea.vmem %s5, %s374
      %p376 = scmp.lt.s32.totalorder %s22, 1
      %s377 = scalar_select %p376, %s22, 1
      %p378 = scmp.lt.s32.totalorder %s23, 1
      %s379 = scalar_select %p378, %s23, 1
      %s380 = smul.addr %s377, 2
      %s381 = sadd.s32 %s379, %s380
      %s382 = scalar_lea.vmem %s6, %s381
      %v384 = vld [vmem:[%s339] sm:$0xff]
      %v385 = vld [vmem:[%s339 + $0x8] sm:$0xff]
      %v386 = vld [vmem:[%s339 + $0x10] sm:$0xff]
      %v387 = vld [vmem:[%s339 + $0x18] sm:$0xff]
      %v388 = vld [vmem:[%s339 + $0x20] sm:$0xff]
      %v389 = vld [vmem:[%s339 + $0x28] sm:$0xff]
      %v390 = vld [vmem:[%s339 + $0x30] sm:$0xff]
      %v391 = vld [vmem:[%s339 + $0x38] sm:$0xff]
      %v392 = vpack.c.bf16 %v385, %v384
      %v393 = vpack.c.bf16 %v387, %v386
      %v394 = vpack.c.bf16 %v389, %v388
      %v395 = vpack.c.bf16 %v391, %v390
      %v396 = vld [vmem:[%s2] sm:$0xf]
      %v397 = vld [vmem:[%s2 + $0x4] sm:$0x3]
      %s398 = scalar_lea.vmem %s339, 8
      %v399 = vld [vmem:[%s398] sm:$0xff]
      %v400 = vld [vmem:[%s398 + $0x8] sm:$0xff]
      %v401 = vld [vmem:[%s398 + $0x10] sm:$0xff]
      %v402 = vld [vmem:[%s398 + $0x18] sm:$0xff]
      %v403 = vld [vmem:[%s398 + $0x20] sm:$0xff]
      %v404 = vld [vmem:[%s398 + $0x28] sm:$0xff]
      %v405 = vld [vmem:[%s398 + $0x30] sm:$0xff]
      %v406 = vld [vmem:[%s398 + $0x38] sm:$0xff]
      %v407 = vpack.c.bf16 %v400, %v399
      %v408 = vpack.c.bf16 %v402, %v401
      %v409 = vpack.c.bf16 %v404, %v403
      %v410 = vpack.c.bf16 %v406, %v405
      %s411 = scalar_lea.vmem %s2, 8
      %v412 = vld [vmem:[%s411] sm:$0xf]
      %v413 = vld [vmem:[%s411 + $0x4] sm:$0x3]
      %v416 = vunpack.c.l.b16 %v412
      %v417 = vunpack.c.l.b16 %v413
      %v418 = vpack.c.b16 %v417, %v416
      %vm419 = vcmask 97280
      %v421 = vsel %vm419, %v407, 0
      %v424 = vsel %vm419, %v408, 0
      %v427 = vsel %vm419, %v409, 0
      %v430 = vsel %vm419, %v410, 0
      %vm432 = vcmask 1045504
      %v434 = vsel %vm432, %v418, 0
      %436 = vmatprep.subr.bf16.mxu0 0
      %437 = vmatpush1.bf16.msra.mxu0 %v434
      %438 = vmatprep.subr.bf16.mxu0 0
      %439 = vmatpush1.bf16.msra.mxu0 0
      %440 = vmatprep.subr.bf16.mxu0 0
      %441 = vmatpush1.bf16.msra.mxu0 0
      %442 = vmatprep.subr.bf16.mxu0 0
      %443 = vmatpush1.bf16.msra.mxu0 0
      %444 = vmatprep.subr.bf16.mxu0 0
      %445 = vmatpush1.bf16.msra.mxu0 0
      %446 = vmatprep.subr.bf16.mxu0 0
      %447 = vmatpush1.bf16.msra.mxu0 0
      %448 = vmatprep.subr.bf16.mxu0 0
      %449 = vmatpush1.bf16.msra.mxu0 0
      %450 = vmatprep.subr.bf16.mxu0 0
      %451 = vmatpush1.bf16.msra.mxu0 0
      %452 = vmatprep.subr.bf16.mxu0 0
      %453 = vmatpush1.bf16.msra.mxu0 0
      %454 = vmatprep.subr.bf16.mxu0 0
      %455 = vmatpush1.bf16.msra.mxu0 0
      %456 = vmatprep.subr.bf16.mxu0 0
      %457 = vmatpush1.bf16.msra.mxu0 0
      %458 = vmatprep.subr.bf16.mxu0 0
      %459 = vmatpush1.bf16.msra.mxu0 0
      %460 = vmatprep.subr.bf16.mxu0 0
      %461 = vmatpush1.bf16.msra.mxu0 0
      %462 = vmatprep.subr.bf16.mxu0 0
      %463 = vmatpush1.bf16.msra.mxu0 0
      %464 = vmatprep.subr.bf16.mxu0 0
      %465 = vmatpush1.bf16.msra.mxu0 0
      %466 = vmatprep.subr.bf16.mxu0 0
      %467 = vmatpush1.bf16.msra.mxu0 0
      %468 = vmatprep.mubr.bf16.mxu0 0
      %469 = vmatmul.mubr.bf16.gmra.mrb[0].mxu0 %v421
      %v470 = vpop.f32.mrb[0].mxu0
      %v471 = vadd.f32 0.0, %v470
      %v472 = vpop.f32.mrb[0].mxu0
      %v473 = vpop.f32.mrb[0].mxu0
      %v474 = vadd.f32 0.0, %v473
      %v475 = vpop.f32.mrb[0].mxu0
      %476 = vmatprep.mubr.bf16.mxu0 0
      %477 = vmatmul.mubr.bf16.gmra.mrb[0].mxu0 %v424
      %v478 = vpop.f32.mrb[0].mxu0
      %v479 = vadd.f32 0.0, %v478
      %v480 = vpop.f32.mrb[0].mxu0
      %v481 = vpop.f32.mrb[0].mxu0
      %v482 = vadd.f32 0.0, %v481
      %v483 = vpop.f32.mrb[0].mxu0
      %484 = vmatprep.mubr.bf16.mxu0 0
      %485 = vmatmul.mubr.bf16.gmra.mrb[0].mxu0 %v427
      %v486 = vpop.f32.mrb[0].mxu0
      %v487 = vadd.f32 0.0, %v486
      %v488 = vpop.f32.mrb[0].mxu0
      %v489 = vpop.f32.mrb[0].mxu0
      %v490 = vadd.f32 0.0, %v489
      %v491 = vpop.f32.mrb[0].mxu0
      %492 = vmatprep.mubr.bf16.mxu0 0
      %493 = vmatmul.mubr.bf16.gmra.mrb[0].mxu0 %v430
      %v494 = vpop.f32.mrb[0].mxu0
      %v495 = vadd.f32 0.0, %v494
      %v496 = vpop.f32.mrb[0].mxu0
      %v497 = vpop.f32.mrb[0].mxu0
      %v498 = vadd.f32 0.0, %v497
      %v499 = vpop.f32.mrb[0].mxu0
      %500 = vdwg.mxu0
      %v503 = vunpack.c.l.b16 %v396
      %v504 = vunpack.c.l.b16 %v397
      %v505 = vpack.c.b16 %v504, %v503
      %v507 = vsel %vm419, %v392, 0
      %v510 = vsel %vm419, %v393, 0
      %v513 = vsel %vm419, %v394, 0
      %v516 = vsel %vm419, %v395, 0
      %v519 = vsel %vm432, %v505, 0
      %521 = vmatprep.subr.bf16.mxu0 0
      %522 = vmatpush1.bf16.msra.mxu0 %v519
      %523 = vmatprep.subr.bf16.mxu0 0
      %524 = vmatpush1.bf16.msra.mxu0 0
      %525 = vmatprep.subr.bf16.mxu0 0
      %526 = vmatpush1.bf16.msra.mxu0 0
      %527 = vmatprep.subr.bf16.mxu0 0
      %528 = vmatpush1.bf16.msra.mxu0 0
      %529 = vmatprep.subr.bf16.mxu0 0
      %530 = vmatpush1.bf16.msra.mxu0 0
      %531 = vmatprep.subr.bf16.mxu0 0
      %532 = vmatpush1.bf16.msra.mxu0 0
      %533 = vmatprep.subr.bf16.mxu0 0
      %534 = vmatpush1.bf16.msra.mxu0 0
      %535 = vmatprep.subr.bf16.mxu0 0
      %536 = vmatpush1.bf16.msra.mxu0 0
      %537 = vmatprep.subr.bf16.mxu0 0
      %538 = vmatpush1.bf16.msra.mxu0 0
      %539 = vmatprep.subr.bf16.mxu0 0
      %540 = vmatpush1.bf16.msra.mxu0 0
      %541 = vmatprep.subr.bf16.mxu0 0
      %542 = vmatpush1.bf16.msra.mxu0 0
      %543 = vmatprep.subr.bf16.mxu0 0
      %544 = vmatpush1.bf16.msra.mxu0 0
      %545 = vmatprep.subr.bf16.mxu0 0
      %546 = vmatpush1.bf16.msra.mxu0 0
      %547 = vmatprep.subr.bf16.mxu0 0
      %548 = vmatpush1.bf16.msra.mxu0 0
      %549 = vmatprep.subr.bf16.mxu0 0
      %550 = vmatpush1.bf16.msra.mxu0 0
      %551 = vmatprep.subr.bf16.mxu0 0
      %552 = vmatpush1.bf16.msra.mxu0 0
      %553 = vmatprep.mubr.bf16.mxu0 0
      %554 = vmatmul.mubr.bf16.gmra.mrb[0].mxu0 %v507
      %v555 = vpop.f32.mrb[0].mxu0
      %v556 = vadd.f32 %v471, %v555
      %v557 = vpop.f32.mrb[0].mxu0
      %v558 = vpop.f32.mrb[0].mxu0
      %v559 = vadd.f32 %v474, %v558
      %v560 = vpop.f32.mrb[0].mxu0
      %561 = vmatprep.mubr.bf16.mxu0 0
      %562 = vmatmul.mubr.bf16.gmra.mrb[0].mxu0 %v510
      %v563 = vpop.f32.mrb[0].mxu0
      %v564 = vadd.f32 %v479, %v563
      %v565 = vpop.f32.mrb[0].mxu0
      %v566 = vpop.f32.mrb[0].mxu0
      %v567 = vadd.f32 %v482, %v566
      %v568 = vpop.f32.mrb[0].mxu0
      %569 = vmatprep.mubr.bf16.mxu0 0
      %570 = vmatmul.mubr.bf16.gmra.mrb[0].mxu0 %v513
      %v571 = vpop.f32.mrb[0].mxu0
      %v572 = vadd.f32 %v487, %v571
      %v573 = vpop.f32.mrb[0].mxu0
      %v574 = vpop.f32.mrb[0].mxu0
      %v575 = vadd.f32 %v490, %v574
      %v576 = vpop.f32.mrb[0].mxu0
      %577 = vmatprep.mubr.bf16.mxu0 0
      %578 = vmatmul.mubr.bf16.gmra.mrb[0].mxu0 %v516
      %v579 = vpop.f32.mrb[0].mxu0
      %v580 = vadd.f32 %v495, %v579
      %v581 = vpop.f32.mrb[0].mxu0
      %v582 = vpop.f32.mrb[0].mxu0
      %v583 = vadd.f32 %v498, %v582
      %v584 = vpop.f32.mrb[0].mxu0
      %585 = vdwg.mxu0
      %s586 = scalar_lea.vmem %s339, 16
      %v587 = vld [vmem:[%s586] sm:$0xff]
      %v588 = vld [vmem:[%s586 + $0x8] sm:$0xff]
      %v589 = vld [vmem:[%s586 + $0x10] sm:$0xff]
      %v590 = vld [vmem:[%s586 + $0x18] sm:$0xff]
      %v591 = vld [vmem:[%s586 + $0x20] sm:$0xff]
      %v592 = vld [vmem:[%s586 + $0x28] sm:$0xff]
      %v593 = vld [vmem:[%s586 + $0x30] sm:$0xff]
      %v594 = vld [vmem:[%s586 + $0x38] sm:$0xff]
      %v595 = vpack.c.bf16 %v588, %v587
      %v596 = vpack.c.bf16 %v590, %v589
      %v597 = vpack.c.bf16 %v592, %v591
      %v598 = vpack.c.bf16 %v594, %v593
      %s599 = scalar_lea.vmem %s2, 16
      %v600 = vld [vmem:[%s599] sm:$0xf]
      %v601 = vld [vmem:[%s599 + $0x4] sm:$0x3]
      %v604 = vunpack.c.l.b16 %v600
      %v605 = vunpack.c.l.b16 %v601
      %v606 = vpack.c.b16 %v605, %v604
      %v608 = vsel %vm419, %v595, 0
      %v611 = vsel %vm419, %v596, 0
      %v614 = vsel %vm419, %v597, 0
      %v617 = vsel %vm419, %v598, 0
      %v620 = vsel %vm432, %v606, 0
      %622 = vmatprep.subr.bf16.mxu0 0
      %623 = vmatpush1.bf16.msra.mxu0 %v620
      %624 = vmatprep.subr.bf16.mxu0 0
      %625 = vmatpush1.bf16.msra.mxu0 0
      %626 = vmatprep.subr.bf16.mxu0 0
      %627 = vmatpush1.bf16.msra.mxu0 0
      %628 = vmatprep.subr.bf16.mxu0 0
      %629 = vmatpush1.bf16.msra.mxu0 0
      %630 = vmatprep.subr.bf16.mxu0 0
      %631 = vmatpush1.bf16.msra.mxu0 0
      %632 = vmatprep.subr.bf16.mxu0 0
      %633 = vmatpush1.bf16.msra.mxu0 0
      %634 = vmatprep.subr.bf16.mxu0 0
      %635 = vmatpush1.bf16.msra.mxu0 0
      %636 = vmatprep.subr.bf16.mxu0 0
      %637 = vmatpush1.bf16.msra.mxu0 0
      %638 = vmatprep.subr.bf16.mxu0 0
      %639 = vmatpush1.bf16.msra.mxu0 0
      %640 = vmatprep.subr.bf16.mxu0 0
      %641 = vmatpush1.bf16.msra.mxu0 0
      %642 = vmatprep.subr.bf16.mxu0 0
      %643 = vmatpush1.bf16.msra.mxu0 0
      %644 = vmatprep.subr.bf16.mxu0 0
      %645 = vmatpush1.bf16.msra.mxu0 0
      %646 = vmatprep.subr.bf16.mxu0 0
      %647 = vmatpush1.bf16.msra.mxu0 0
      %648 = vmatprep.subr.bf16.mxu0 0
      %649 = vmatpush1.bf16.msra.mxu0 0
      %650 = vmatprep.subr.bf16.mxu0 0
      %651 = vmatpush1.bf16.msra.mxu0 0
      %652 = vmatprep.subr.bf16.mxu0 0
      %653 = vmatpush1.bf16.msra.mxu0 0
      %654 = vmatprep.mubr.bf16.mxu0 0
      %655 = vmatmul.mubr.bf16.gmra.mrb[0].mxu0 %v608
      %v656 = vpop.f32.mrb[0].mxu0
      %v657 = vadd.f32 0.0, %v656
      %v658 = vpop.f32.mrb[0].mxu0
      %v659 = vpop.f32.mrb[0].mxu0
      %v660 = vadd.f32 0.0, %v659
      %v661 = vpop.f32.mrb[0].mxu0
      %662 = vmatprep.mubr.bf16.mxu0 0
      %663 = vmatmul.mubr.bf16.gmra.mrb[0].mxu0 %v611
      %v664 = vpop.f32.mrb[0].mxu0
      %v665 = vadd.f32 0.0, %v664
      %v666 = vpop.f32.mrb[0].mxu0
      %v667 = vpop.f32.mrb[0].mxu0
      %v668 = vadd.f32 0.0, %v667
      %v669 = vpop.f32.mrb[0].mxu0
      %670 = vmatprep.mubr.bf16.mxu0 0
      %671 = vmatmul.mubr.bf16.gmra.mrb[0].mxu0 %v614
      %v672 = vpop.f32.mrb[0].mxu0
      %v673 = vadd.f32 0.0, %v672
      %v674 = vpop.f32.mrb[0].mxu0
      %v675 = vpop.f32.mrb[0].mxu0
      %v676 = vadd.f32 0.0, %v675
      %v677 = vpop.f32.mrb[0].mxu0
      %678 = vmatprep.mubr.bf16.mxu0 0
      %679 = vmatmul.mubr.bf16.gmra.mrb[0].mxu0 %v617
      %v680 = vpop.f32.mrb[0].mxu0
      %v681 = vadd.f32 0.0, %v680
      %v682 = vpop.f32.mrb[0].mxu0
      %v683 = vpop.f32.mrb[0].mxu0
      %v684 = vadd.f32 0.0, %v683
      %v685 = vpop.f32.mrb[0].mxu0
      %686 = vdwg.mxu0
      %v687 = vadd.f32 %v556, %v657
      %v688 = vadd.f32 %v559, %v660
      %v689 = vadd.f32 %v564, %v665
      %v690 = vadd.f32 %v567, %v668
      %v691 = vadd.f32 %v572, %v673
      %v692 = vadd.f32 %v575, %v676
      %v693 = vadd.f32 %v580, %v681
      %v694 = vadd.f32 %v583, %v684
      %v695 = vld [vmem:[%s348] sm:$0xff]
      %v696 = vld [vmem:[%s348 + $0x8] sm:$0xff]
      %v697 = vld [vmem:[%s348 + $0x10] sm:$0xff]
      %v698 = vld [vmem:[%s348 + $0x18] sm:$0xff]
      %v699 = vld [vmem:[%s348 + $0x20] sm:$0xff]
      %v700 = vld [vmem:[%s348 + $0x28] sm:$0xff]
      %v701 = vld [vmem:[%s348 + $0x30] sm:$0xff]
      %v702 = vld [vmem:[%s348 + $0x38] sm:$0xff]
      %v703 = vpack.c.bf16 %v696, %v695
      %v704 = vpack.c.bf16 %v698, %v697
      %v705 = vpack.c.bf16 %v700, %v699
      %v706 = vpack.c.bf16 %v702, %v701
      %s707 = scalar_lea.vmem %s348, 8
      %v708 = vld [vmem:[%s707] sm:$0xff]
      %v709 = vld [vmem:[%s707 + $0x8] sm:$0xff]
      %v710 = vld [vmem:[%s707 + $0x10] sm:$0xff]
      %v711 = vld [vmem:[%s707 + $0x18] sm:$0xff]
      %v712 = vld [vmem:[%s707 + $0x20] sm:$0xff]
      %v713 = vld [vmem:[%s707 + $0x28] sm:$0xff]
      %v714 = vld [vmem:[%s707 + $0x30] sm:$0xff]
      %v715 = vld [vmem:[%s707 + $0x38] sm:$0xff]
      %v716 = vpack.c.bf16 %v709, %v708
      %v717 = vpack.c.bf16 %v711, %v710
      %v718 = vpack.c.bf16 %v713, %v712
      %v719 = vpack.c.bf16 %v715, %v714
      %v721 = vsel %vm419, %v716, 0
      %v724 = vsel %vm419, %v717, 0
      %v727 = vsel %vm419, %v718, 0
      %v730 = vsel %vm419, %v719, 0
      %732 = vmatprep.subr.bf16.mxu0 0
      %733 = vmatpush1.bf16.msra.mxu0 %v434
      %734 = vmatprep.subr.bf16.mxu0 0
      %735 = vmatpush1.bf16.msra.mxu0 0
      %736 = vmatprep.subr.bf16.mxu0 0
      %737 = vmatpush1.bf16.msra.mxu0 0
      %738 = vmatprep.subr.bf16.mxu0 0
      %739 = vmatpush1.bf16.msra.mxu0 0
      %740 = vmatprep.subr.bf16.mxu0 0
      %741 = vmatpush1.bf16.msra.mxu0 0
      %742 = vmatprep.subr.bf16.mxu0 0
      %743 = vmatpush1.bf16.msra.mxu0 0
      %744 = vmatprep.subr.bf16.mxu0 0
      %745 = vmatpush1.bf16.msra.mxu0 0
      %746 = vmatprep.subr.bf16.mxu0 0
      %747 = vmatpush1.bf16.msra.mxu0 0
      %748 = vmatprep.subr.bf16.mxu0 0
      %749 = vmatpush1.bf16.msra.mxu0 0
      %750 = vmatprep.subr.bf16.mxu0 0
      %751 = vmatpush1.bf16.msra.mxu0 0
      %752 = vmatprep.subr.bf16.mxu0 0
      %753 = vmatpush1.bf16.msra.mxu0 0
      %754 = vmatprep.subr.bf16.mxu0 0
      %755 = vmatpush1.bf16.msra.mxu0 0
      %756 = vmatprep.subr.bf16.mxu0 0
      %757 = vmatpush1.bf16.msra.mxu0 0
      %758 = vmatprep.subr.bf16.mxu0 0
      %759 = vmatpush1.bf16.msra.mxu0 0
      %760 = vmatprep.subr.bf16.mxu0 0
      %761 = vmatpush1.bf16.msra.mxu0 0
      %762 = vmatprep.subr.bf16.mxu0 0
      %763 = vmatpush1.bf16.msra.mxu0 0
      %764 = vmatprep.mubr.bf16.mxu0 0
      %765 = vmatmul.mubr.bf16.gmra.mrb[0].mxu0 %v721
      %v766 = vpop.f32.mrb[0].mxu0
      %v767 = vadd.f32 0.0, %v766
      %v768 = vpop.f32.mrb[0].mxu0
      %v769 = vpop.f32.mrb[0].mxu0
      %v770 = vadd.f32 0.0, %v769
      %v771 = vpop.f32.mrb[0].mxu0
      %772 = vmatprep.mubr.bf16.mxu0 0
      %773 = vmatmul.mubr.bf16.gmra.mrb[0].mxu0 %v724
      %v774 = vpop.f32.mrb[0].mxu0
      %v775 = vadd.f32 0.0, %v774
      %v776 = vpop.f32.mrb[0].mxu0
      %v777 = vpop.f32.mrb[0].mxu0
      %v778 = vadd.f32 0.0, %v777
      %v779 = vpop.f32.mrb[0].mxu0
      %780 = vmatprep.mubr.bf16.mxu0 0
      %781 = vmatmul.mubr.bf16.gmra.mrb[0].mxu0 %v727
      %v782 = vpop.f32.mrb[0].mxu0
      %v783 = vadd.f32 0.0, %v782
      %v784 = vpop.f32.mrb[0].mxu0
      %v785 = vpop.f32.mrb[0].mxu0
      %v786 = vadd.f32 0.0, %v785
      %v787 = vpop.f32.mrb[0].mxu0
      %788 = vmatprep.mubr.bf16.mxu0 0
      %789 = vmatmul.mubr.bf16.gmra.mrb[0].mxu0 %v730
      %v790 = vpop.f32.mrb[0].mxu0
      %v791 = vadd.f32 0.0, %v790
      %v792 = vpop.f32.mrb[0].mxu0
      %v793 = vpop.f32.mrb[0].mxu0
      %v794 = vadd.f32 0.0, %v793
      %v795 = vpop.f32.mrb[0].mxu0
      %796 = vdwg.mxu0
      %v798 = vsel %vm419, %v703, 0
      %v801 = vsel %vm419, %v704, 0
      %v804 = vsel %vm419, %v705, 0
      %v807 = vsel %vm419, %v706, 0
      %809 = vmatprep.subr.bf16.mxu0 0
      %810 = vmatpush1.bf16.msra.mxu0 %v519
      %811 = vmatprep.subr.bf16.mxu0 0
      %812 = vmatpush1.bf16.msra.mxu0 0
      %813 = vmatprep.subr.bf16.mxu0 0
      %814 = vmatpush1.bf16.msra.mxu0 0
      %815 = vmatprep.subr.bf16.mxu0 0
      %816 = vmatpush1.bf16.msra.mxu0 0
      %817 = vmatprep.subr.bf16.mxu0 0
      %818 = vmatpush1.bf16.msra.mxu0 0
      %819 = vmatprep.subr.bf16.mxu0 0
      %820 = vmatpush1.bf16.msra.mxu0 0
      %821 = vmatprep.subr.bf16.mxu0 0
      %822 = vmatpush1.bf16.msra.mxu0 0
      %823 = vmatprep.subr.bf16.mxu0 0
      %824 = vmatpush1.bf16.msra.mxu0 0
      %825 = vmatprep.subr.bf16.mxu0 0
      %826 = vmatpush1.bf16.msra.mxu0 0
      %827 = vmatprep.subr.bf16.mxu0 0
      %828 = vmatpush1.bf16.msra.mxu0 0
      %829 = vmatprep.subr.bf16.mxu0 0
      %830 = vmatpush1.bf16.msra.mxu0 0
      %831 = vmatprep.subr.bf16.mxu0 0
      %832 = vmatpush1.bf16.msra.mxu0 0
      %833 = vmatprep.subr.bf16.mxu0 0
      %834 = vmatpush1.bf16.msra.mxu0 0
      %835 = vmatprep.subr.bf16.mxu0 0
      %836 = vmatpush1.bf16.msra.mxu0 0
      %837 = vmatprep.subr.bf16.mxu0 0
      %838 = vmatpush1.bf16.msra.mxu0 0
      %839 = vmatprep.subr.bf16.mxu0 0
      %840 = vmatpush1.bf16.msra.mxu0 0
      %841 = vmatprep.mubr.bf16.mxu0 0
      %842 = vmatmul.mubr.bf16.gmra.mrb[0].mxu0 %v798
      %v843 = vpop.f32.mrb[0].mxu0
      %v844 = vadd.f32 %v767, %v843
      %v845 = vpop.f32.mrb[0].mxu0
      %v846 = vpop.f32.mrb[0].mxu0
      %v847 = vadd.f32 %v770, %v846
      %v848 = vpop.f32.mrb[0].mxu0
      %849 = vmatprep.mubr.bf16.mxu0 0
      %850 = vmatmul.mubr.bf16.gmra.mrb[0].mxu0 %v801
      %v851 = vpop.f32.mrb[0].mxu0
      %v852 = vadd.f32 %v775, %v851
      %v853 = vpop.f32.mrb[0].mxu0
      %v854 = vpop.f32.mrb[0].mxu0
      %v855 = vadd.f32 %v778, %v854
      %v856 = vpop.f32.mrb[0].mxu0
      %857 = vmatprep.mubr.bf16.mxu0 0
      %858 = vmatmul.mubr.bf16.gmra.mrb[0].mxu0 %v804
      %v859 = vpop.f32.mrb[0].mxu0
      %v860 = vadd.f32 %v783, %v859
      %v861 = vpop.f32.mrb[0].mxu0
      %v862 = vpop.f32.mrb[0].mxu0
      %v863 = vadd.f32 %v786, %v862
      %v864 = vpop.f32.mrb[0].mxu0
      %865 = vmatprep.mubr.bf16.mxu0 0
      %866 = vmatmul.mubr.bf16.gmra.mrb[0].mxu0 %v807
      %v867 = vpop.f32.mrb[0].mxu0
      %v868 = vadd.f32 %v791, %v867
      %v869 = vpop.f32.mrb[0].mxu0
      %v870 = vpop.f32.mrb[0].mxu0
      %v871 = vadd.f32 %v794, %v870
      %v872 = vpop.f32.mrb[0].mxu0
      %873 = vdwg.mxu0
      %s874 = scalar_lea.vmem %s348, 16
      %v875 = vld [vmem:[%s874] sm:$0xff]
      %v876 = vld [vmem:[%s874 + $0x8] sm:$0xff]
      %v877 = vld [vmem:[%s874 + $0x10] sm:$0xff]
      %v878 = vld [vmem:[%s874 + $0x18] sm:$0xff]
      %v879 = vld [vmem:[%s874 + $0x20] sm:$0xff]
      %v880 = vld [vmem:[%s874 + $0x28] sm:$0xff]
      %v881 = vld [vmem:[%s874 + $0x30] sm:$0xff]
      %v882 = vld [vmem:[%s874 + $0x38] sm:$0xff]
      %v883 = vpack.c.bf16 %v876, %v875
      %v884 = vpack.c.bf16 %v878, %v877
      %v885 = vpack.c.bf16 %v880, %v879
      %v886 = vpack.c.bf16 %v882, %v881
      %v888 = vsel %vm419, %v883, 0
      %v891 = vsel %vm419, %v884, 0
      %v894 = vsel %vm419, %v885, 0
      %v897 = vsel %vm419, %v886, 0
      %899 = vmatprep.subr.bf16.mxu0 0
      %900 = vmatpush1.bf16.msra.mxu0 %v620
      %901 = vmatprep.subr.bf16.mxu0 0
      %902 = vmatpush1.bf16.msra.mxu0 0
      %903 = vmatprep.subr.bf16.mxu0 0
      %904 = vmatpush1.bf16.msra.mxu0 0
      %905 = vmatprep.subr.bf16.mxu0 0
      %906 = vmatpush1.bf16.msra.mxu0 0
      %907 = vmatprep.subr.bf16.mxu0 0
      %908 = vmatpush1.bf16.msra.mxu0 0
      %909 = vmatprep.subr.bf16.mxu0 0
      %910 = vmatpush1.bf16.msra.mxu0 0
      %911 = vmatprep.subr.bf16.mxu0 0
      %912 = vmatpush1.bf16.msra.mxu0 0
      %913 = vmatprep.subr.bf16.mxu0 0
      %914 = vmatpush1.bf16.msra.mxu0 0
      %915 = vmatprep.subr.bf16.mxu0 0
      %916 = vmatpush1.bf16.msra.mxu0 0
      %917 = vmatprep.subr.bf16.mxu0 0
      %918 = vmatpush1.bf16.msra.mxu0 0
      %919 = vmatprep.subr.bf16.mxu0 0
      %920 = vmatpush1.bf16.msra.mxu0 0
      %921 = vmatprep.subr.bf16.mxu0 0
      %922 = vmatpush1.bf16.msra.mxu0 0
      %923 = vmatprep.subr.bf16.mxu0 0
      %924 = vmatpush1.bf16.msra.mxu0 0
      %925 = vmatprep.subr.bf16.mxu0 0
      %926 = vmatpush1.bf16.msra.mxu0 0
      %927 = vmatprep.subr.bf16.mxu0 0
      %928 = vmatpush1.bf16.msra.mxu0 0
      %929 = vmatprep.subr.bf16.mxu0 0
      %930 = vmatpush1.bf16.msra.mxu0 0
      %931 = vmatprep.mubr.bf16.mxu0 0
      %932 = vmatmul.mubr.bf16.gmra.mrb[0].mxu0 %v888
      %v933 = vpop.f32.mrb[0].mxu0
      %v934 = vadd.f32 0.0, %v933
      %v935 = vpop.f32.mrb[0].mxu0
      %v936 = vpop.f32.mrb[0].mxu0
      %v937 = vadd.f32 0.0, %v936
      %v938 = vpop.f32.mrb[0].mxu0
      %939 = vmatprep.mubr.bf16.mxu0 0
      %940 = vmatmul.mubr.bf16.gmra.mrb[0].mxu0 %v891
      %v941 = vpop.f32.mrb[0].mxu0
      %v942 = vadd.f32 0.0, %v941
      %v943 = vpop.f32.mrb[0].mxu0
      %v944 = vpop.f32.mrb[0].mxu0
      %v945 = vadd.f32 0.0, %v944
      %v946 = vpop.f32.mrb[0].mxu0
      %947 = vmatprep.mubr.bf16.mxu0 0
      %948 = vmatmul.mubr.bf16.gmra.mrb[0].mxu0 %v894
      %v949 = vpop.f32.mrb[0].mxu0
      %v950 = vadd.f32 0.0, %v949
      %v951 = vpop.f32.mrb[0].mxu0
      %v952 = vpop.f32.mrb[0].mxu0
      %v953 = vadd.f32 0.0, %v952
      %v954 = vpop.f32.mrb[0].mxu0
      %955 = vmatprep.mubr.bf16.mxu0 0
      %956 = vmatmul.mubr.bf16.gmra.mrb[0].mxu0 %v897
      %v957 = vpop.f32.mrb[0].mxu0
      %v958 = vadd.f32 0.0, %v957
      %v959 = vpop.f32.mrb[0].mxu0
      %v960 = vpop.f32.mrb[0].mxu0
      %v961 = vadd.f32 0.0, %v960
      %v962 = vpop.f32.mrb[0].mxu0
      %963 = vdwg.mxu0
      %v964 = vadd.f32 %v844, %v934
      %v965 = vadd.f32 %v847, %v937
      %v966 = vadd.f32 %v852, %v942
      %v967 = vadd.f32 %v855, %v945
      %v968 = vadd.f32 %v860, %v950
      %v969 = vadd.f32 %v863, %v953
      %v970 = vadd.f32 %v868, %v958
      %v971 = vadd.f32 %v871, %v961
      %v972 = vadd.f32 %v687, %v688
      %v973 = vadd.f32 %v972, %v689
      %v974 = vadd.f32 %v973, %v690
      %v975 = vadd.f32 %v974, %v691
      %v976 = vadd.f32 %v975, %v692
      %v977 = vadd.f32 %v976, %v693
      %v978 = vadd.f32 %v977, %v694
      %v979 = vrot.slane %v978, 4
      %v980 = vadd.f32 %v978, %v979
      %v981 = vrot.slane %v980, 2
      %v982 = vadd.f32 %v980, %v981
      %v983 = vrot.slane %v982, 1
      %v984 = vadd.f32 %v982, %v983
      %v985 = vadd.f32 %v964, %v965
      %v986 = vadd.f32 %v985, %v966
      %v987 = vadd.f32 %v986, %v967
      %v988 = vadd.f32 %v987, %v968
      %v989 = vadd.f32 %v988, %v969
      %v990 = vadd.f32 %v989, %v970
      %v991 = vadd.f32 %v990, %v971
      %v992 = vrot.slane %v991, 4
      %v993 = vadd.f32 %v991, %v992
      %v994 = vrot.slane %v993, 2
      %v995 = vadd.f32 %v993, %v994
      %v996 = vrot.slane %v995, 1
      %v997 = vadd.f32 %v995, %v996
      %v998 = vadd.f32 %v984, %v997
      %999 = vst [vmem:[%s375] sm:$0x1] %v998
      %v1000 = vmul.f32 %v687, %v687
      %v1001 = vmul.f32 %v688, %v688
      %v1002 = vmul.f32 %v689, %v689
      %v1003 = vmul.f32 %v690, %v690
      %v1004 = vmul.f32 %v691, %v691
      %v1005 = vmul.f32 %v692, %v692
      %v1006 = vmul.f32 %v693, %v693
      %v1007 = vmul.f32 %v694, %v694
      %v1008 = vadd.f32 %v1000, %v1001
      %v1009 = vadd.f32 %v1008, %v1002
      %v1010 = vadd.f32 %v1009, %v1003
      %v1011 = vadd.f32 %v1010, %v1004
      %v1012 = vadd.f32 %v1011, %v1005
      %v1013 = vadd.f32 %v1012, %v1006
      %v1014 = vadd.f32 %v1013, %v1007
      %v1015 = vrot.slane %v1014, 4
      %v1016 = vadd.f32 %v1014, %v1015
      %v1017 = vrot.slane %v1016, 2
      %v1018 = vadd.f32 %v1016, %v1017
      %v1019 = vrot.slane %v1018, 1
      %v1020 = vadd.f32 %v1018, %v1019
      %v1021 = vmul.f32 %v964, %v964
      %v1022 = vmul.f32 %v965, %v965
      %v1023 = vmul.f32 %v966, %v966
      %v1024 = vmul.f32 %v967, %v967
      %v1025 = vmul.f32 %v968, %v968
      %v1026 = vmul.f32 %v969, %v969
      %v1027 = vmul.f32 %v970, %v970
      %v1028 = vmul.f32 %v971, %v971
      %v1029 = vadd.f32 %v1021, %v1022
      %v1030 = vadd.f32 %v1029, %v1023
      %v1031 = vadd.f32 %v1030, %v1024
      %v1032 = vadd.f32 %v1031, %v1025
      %v1033 = vadd.f32 %v1032, %v1026
      %v1034 = vadd.f32 %v1033, %v1027
      %v1035 = vadd.f32 %v1034, %v1028
      %v1036 = vrot.slane %v1035, 4
      %v1037 = vadd.f32 %v1035, %v1036
      %v1038 = vrot.slane %v1037, 2
      %v1039 = vadd.f32 %v1037, %v1038
      %v1040 = vrot.slane %v1039, 1
      %v1041 = vadd.f32 %v1039, %v1040
      %v1042 = vadd.f32 %v1020, %v1041
      %1043 = vst [vmem:[%s382] sm:$0x1] %v1042
      %v1044 = vpack.c.bf16 %v687, %v687
      %v1045 = vpack.c.bf16 %v688, %v688
      %v1046 = vpack.c.bf16 %v689, %v689
      %v1047 = vpack.c.bf16 %v690, %v690
      %v1048 = vpack.c.bf16 %v691, %v691
      %v1049 = vpack.c.bf16 %v692, %v692
      %v1050 = vpack.c.bf16 %v693, %v693
      %v1051 = vpack.c.bf16 %v694, %v694
      %1052 = vst [vmem:[%s357] sm:$0xf] %v1044
      %1053 = vst [vmem:[%s357 + $0x4] sm:$0xf] %v1045
      %1054 = vst [vmem:[%s357 + $0x8] sm:$0xf] %v1046
      %1055 = vst [vmem:[%s357 + $0xc] sm:$0xf] %v1047
      %1056 = vst [vmem:[%s357 + $0x10] sm:$0xf] %v1048
      %1057 = vst [vmem:[%s357 + $0x14] sm:$0xf] %v1049
      %1058 = vst [vmem:[%s357 + $0x18] sm:$0xf] %v1050
      %1059 = vst [vmem:[%s357 + $0x1c] sm:$0xf] %v1051
      %v1060 = vpack.c.bf16 %v964, %v964
      %v1061 = vpack.c.bf16 %v965, %v965
      %v1062 = vpack.c.bf16 %v966, %v966
      %v1063 = vpack.c.bf16 %v967, %v967
      %v1064 = vpack.c.bf16 %v968, %v968
      %v1065 = vpack.c.bf16 %v969, %v969
      %v1066 = vpack.c.bf16 %v970, %v970
      %v1067 = vpack.c.bf16 %v971, %v971
      %1068 = vst [vmem:[%s367] sm:$0xf] %v1060
      %1069 = vst [vmem:[%s367 + $0x4] sm:$0xf] %v1061
      %1070 = vst [vmem:[%s367 + $0x8] sm:$0xf] %v1062
      %1071 = vst [vmem:[%s367 + $0xc] sm:$0xf] %v1063
      %1072 = vst [vmem:[%s367 + $0x10] sm:$0xf] %v1064
      %1073 = vst [vmem:[%s367 + $0x14] sm:$0xf] %v1065
      %1074 = vst [vmem:[%s367 + $0x18] sm:$0xf] %v1066
      %1075 = vst [vmem:[%s367 + $0x1c] sm:$0xf] %v1067
      %s1076 = smul.u32 8, %s23
      %p1077 = scmp.lt.s32.totalorder %s22, 1
      %s1078 = scalar_select %p1077, %s22, 1
      %p1079 = scmp.lt.s32.totalorder %s1076, 15
      %s1080 = scalar_select %p1079, %s1076, 15
      %s1081 = smul.addr %s1078, 16
      %s1082 = sadd.s32 %s1080, %s1081
      %s1083 = smul.addr %s1082, 4
      %s1084 = scalar_lea.vmem %s3, %s1083
      %s1085 = smul.u32 8, %s23
      %p1086 = scmp.lt.s32.totalorder %s22, 1
      %s1087 = scalar_select %p1086, %s22, 1
      %p1088 = scmp.lt.s32.totalorder %s1085, 15
      %s1089 = scalar_select %p1088, %s1085, 15
      %s1090 = smul.addr %s1087, 16
      %s1091 = sadd.s32 %s1089, %s1090
      %s1092 = smul.addr %s1091, 4
      %s1093 = scalar_lea.vmem %s4, %s1092
      %p1094 = scmp.lt.s32.totalorder %s22, 1
      %s1095 = scalar_select %p1094, %s22, 1
      %p1096 = scmp.lt.s32.totalorder %s23, 1
      %s1097 = scalar_select %p1096, %s23, 1
      %s1098 = smul.addr %s1095, 2
      %s1099 = sadd.s32 %s1097, %s1098
      %s1100 = scalar_lea.vmem %s5, %s1099
      %p1101 = scmp.lt.s32.totalorder %s22, 1
      %s1102 = scalar_select %p1101, %s22, 1
      %p1103 = scmp.lt.s32.totalorder %s23, 1
      %s1104 = scalar_select %p1103, %s23, 1
      %s1105 = smul.addr %s1102, 2
      %s1106 = sadd.s32 %s1104, %s1105
      %s1107 = scalar_lea.vmem %s6, %s1106
      // Predicated region
      $region33: #{conv_block_forward.2} parent=31 // pred_check
        %p1108 = pneg %p127
      $region34: #{conv_block_forward.2} parent=31 // pred_check_branch
        %1110 = sbr.rel (%p1108) target = $region36
      $region35: #{conv_block_forward.2} parent=31 // pred_region
        %s1111 = smul.u32 8, %s23
      $region36: #{conv_block_forward.2} parent=31 // pred_fallthru
        _
      // Predicated region
      $region37: #{conv_block_forward.2} parent=31 // pred_check
        %p1112 = pneg %p155
      $region38: #{conv_block_forward.2} parent=31 // pred_check_branch
        %1114 = sbr.rel (%p1112) target = $region40
      $region39: #{conv_block_forward.2} parent=31 // pred_region
        %s1115 = smul.u32 8, %s23
      $region40: #{conv_block_forward.2} parent=31 // pred_fallthru
        _
      // Predicated region
      $region41: #{conv_block_forward.2} parent=31 // pred_check
        %p1116 = pneg %p183
      $region42: #{conv_block_forward.2} parent=31 // pred_check_branch
        %1118 = sbr.rel (%p1116) target = $region44
      $region43: #{conv_block_forward.2} parent=31 // pred_region
        _
      $region44: #{conv_block_forward.2} parent=31 // pred_fallthru
        _
      // Predicated region
      $region45: #{conv_block_forward.2} parent=31 // pred_check
        %p1119 = pneg %p211
      $region46: #{conv_block_forward.2} parent=31 // pred_check_branch
        %1121 = sbr.rel (%p1119) target = $region48
      $region47: #{conv_block_forward.2} parent=31 // pred_region
        _
      $region48: #{conv_block_forward.2} parent=31 // pred_fallthru
        _
    $region32: #{conv_block_forward.2} parent=5 // pred_fallthru
      _
    %p1122 = scmp.le.s32.totalorder 2, %s13
    // Predicated region
    $region49: #{conv_block_forward.2} parent=5 // pred_check
      %p1123 = pneg %p1122
    $region50: #{conv_block_forward.2} parent=5 // pred_check_branch
      %1125 = sbr.rel (%p1123) target = $region52
    $region51: #{conv_block_forward.2} parent=5 // pred_region
      %s1126 = ssub.s32 %s13, 2
      // Predicated region
      $region53: #{conv_block_forward.2} parent=51 // pred_check
        %p1127 = pneg %p133
      $region54: #{conv_block_forward.2} parent=51 // pred_check_branch
        %1129 = sbr.rel (%p1127) target = $region56
      $region55: #{conv_block_forward.2} parent=51 // pred_region
        %s1130 = smul.u32 8, %s25
        %p1131 = scmp.lt.s32.totalorder %s24, 1
        %s1132 = scalar_select %p1131, %s24, 1
        %p1133 = scmp.lt.s32.totalorder %s1130, 15
        %s1134 = scalar_select %p1133, %s1130, 15
        %s1135 = smul.addr %s1132, 16
        %s1136 = sadd.s32 %s1134, %s1135
        %s1137 = smul.addr %s1136, 4
        %s1138 = scalar_lea.vmem %s3, %s1137
      $region56: #{conv_block_forward.2} parent=51 // pred_fallthru
        _
      // Predicated region
      $region57: #{conv_block_forward.2} parent=51 // pred_check
        %p1139 = pneg %p161
      $region58: #{conv_block_forward.2} parent=51 // pred_check_branch
        %1141 = sbr.rel (%p1139) target = $region60
      $region59: #{conv_block_forward.2} parent=51 // pred_region
        %s1142 = smul.u32 8, %s25
        %p1143 = scmp.lt.s32.totalorder %s24, 1
        %s1144 = scalar_select %p1143, %s24, 1
        %p1145 = scmp.lt.s32.totalorder %s1142, 15
        %s1146 = scalar_select %p1145, %s1142, 15
        %s1147 = smul.addr %s1144, 16
        %s1148 = sadd.s32 %s1146, %s1147
        %s1149 = smul.addr %s1148, 4
        %s1150 = scalar_lea.vmem %s4, %s1149
      $region60: #{conv_block_forward.2} parent=51 // pred_fallthru
        _
      // Predicated region
      $region61: #{conv_block_forward.2} parent=51 // pred_check
        %p1151 = pneg %p189
      $region62: #{conv_block_forward.2} parent=51 // pred_check_branch
        %1153 = sbr.rel (%p1151) target = $region64
      $region63: #{conv_block_forward.2} parent=51 // pred_region
        %p1154 = scmp.lt.s32.totalorder %s24, 1
        %s1155 = scalar_select %p1154, %s24, 1
        %p1156 = scmp.lt.s32.totalorder %s25, 1
        %s1157 = scalar_select %p1156, %s25, 1
        %s1158 = smul.addr %s1155, 2
        %s1159 = sadd.s32 %s1157, %s1158
        %s1160 = scalar_lea.vmem %s5, %s1159
      $region64: #{conv_block_forward.2} parent=51 // pred_fallthru
        _
      // Predicated region
      $region65: #{conv_block_forward.2} parent=51 // pred_check
        %p1161 = pneg %p217
      $region66: #{conv_block_forward.2} parent=51 // pred_check_branch
        %1163 = sbr.rel (%p1161) target = $region68
      $region67: #{conv_block_forward.2} parent=51 // pred_region
        %p1164 = scmp.lt.s32.totalorder %s24, 1
        %s1165 = scalar_select %p1164, %s24, 1
        %p1166 = scmp.lt.s32.totalorder %s25, 1
        %s1167 = scalar_select %p1166, %s25, 1
        %s1168 = smul.addr %s1165, 2
        %s1169 = sadd.s32 %s1167, %s1168
        %s1170 = scalar_lea.vmem %s6, %s1169
      $region68: #{conv_block_forward.2} parent=51 // pred_fallthru
        _
    $region52: #{conv_block_forward.2} parent=5 // pred_fallthru
      _
  $region6: #{conv_block_forward.2} parent=0 // loop_footer
    %s17 = sadd.s32 1, %s13
  $region7: #{conv_block_forward.2} parent=0 // loop_footer_branch
    %12 = sbr.rel target = $region3
  $region8: #{conv_block_forward.2} parent=0 // loop_exit
    _

</llo_original>
